<compile_context>
chip_gen: v6e
topology: v6e:2x2x1
jax: 0.10.0
libtpu: 0.0.40
codegen_flags: <defaults>
</compile_context>

<pallas_src>
import functools

import jax
import jax.numpy as jnp
from jax.experimental import pallas as pl
from jax.experimental.pallas import tpu as pltpu


# --------------------------------------------------------------------------- #
# Kernel
# --------------------------------------------------------------------------- #
def _textcnn_kernel(x_ref, w_ref, bias_ref, mask_ref, fcw_ref, fcb_ref, out_ref,
                    *, batch_tile, seq_len, leaky_slope):
    """Fused conv-as-matmul + LeakyReLU + masked max-over-time + fc + softmax."""
    # One MXU issue: (TB*L, K) bf16 @ (K, 128) bf16 -> f32 packed conv outputs.
    conv = jnp.dot(x_ref[...], w_ref[...], preferred_element_type=jnp.float32)
    conv = conv + bias_ref[...]                               # (rows,128)+(1,128)

    # LeakyReLU (torch default slope 0.01): mul + max, f32 epilogue (v5e-safe).
    act = jnp.maximum(conv, leaky_slope * conv)

    # Max over time per example.  Invalid time steps (p >= L-k+1) and pad lanes
    # are handled by the additive -1e30 mask built in the packer.
    ncol = act.shape[-1]
    act3 = act.reshape(batch_tile, seq_len, ncol)             # layout-free split
    pooled = jnp.max(act3 + mask_ref[...][None, :, :], axis=1)  # (TB, 128) f32

    # Dropout: identity at inference time.
    # Packed fc in bf16 (f32 accumulation); pad class lanes get bias -1e30 so
    # they vanish in the softmax.
    logits = jnp.dot(pooled.astype(jnp.bfloat16), fcw_ref[...],
                     preferred_element_type=jnp.float32)
    logits = logits + fcb_ref[...]                            # (TB, 128)

    # task == 'classification': softmax over the class lanes.
    m = jnp.max(logits, axis=1, keepdims=True)
    e = jnp.exp(logits - m)
    s = jnp.sum(e, axis=1, keepdims=True)
    out_ref[...] = e * pl.reciprocal(s, approx=True)


# --------------------------------------------------------------------------- #
# One-time parameter packing (hoisted out of the per-call path)
# --------------------------------------------------------------------------- #
def pack_textcnn_params(params, kernel_sizes, max_length, *, channel_num,
                        n_classes=5):
    emb_table = params["embedding"].astype(jnp.float32)        # (V, E)
    V, E = emb_table.shape
    C = channel_num
    L = max_length
    maxk = max(kernel_sizes)
    nk = len(kernel_sizes)
    feat_dim = nk * C

    e_pad = ((E + 63) // 64) * 64                 # per-tap embed columns
    K = maxk * e_pad                              # contraction dim (lane-aligned)
    ncol = ((feat_dim + 127) // 128) * 128        # packed conv-channel lanes
    nout = ((n_classes + 127) // 128) * 128       # packed class lanes

    # Embedding table padded + pre-cast to bf16 (im2col gather stays bf16).
    table_pad = jnp.zeros((V, e_pad), jnp.bfloat16)
    table_pad = table_pad.at[:, :E].set(emb_table.astype(jnp.bfloat16))

    # Pack every conv filter into one lane-dense RHS + bias + additive time mask.
    # NOTE: taps i >= k stay ZERO here -- required by the clamped im2col gather.
    w_all = jnp.zeros((K, ncol), jnp.float32)
    bias_all = jnp.zeros((1, ncol), jnp.float32)
    mask = jnp.zeros((L, ncol), jnp.float32)
    t_iota = jnp.arange(L)[:, None].astype(jnp.float32)
    for j, k in enumerate(kernel_sizes):
        wj = params[f"conv{k}_w"].astype(jnp.float32)           # (C, k, E)
        bj = params[f"conv{k}_b"].astype(jnp.float32)           # (C,)
        col0 = j * C
        for i in range(k):
            w_all = w_all.at[i * e_pad:i * e_pad + E,
                             col0:col0 + C].set(wj[:, i, :].T)
        bias_all = bias_all.at[0, col0:col0 + C].set(bj)
        valid = (t_iota < float(L - k + 1)).astype(jnp.float32)  # (L, 1)
        mask = mask.at[:, col0:col0 + C].set((valid - 1.0) * 1e30)
    w_all = w_all.astype(jnp.bfloat16)

    # Pack the fc layer so the classes live in a 128-lane slab (bf16 weights).
    fcw = params["fc_w"].astype(jnp.float32)                    # (n_classes, feat)
    fcb = params["fc_b"].astype(jnp.float32)                    # (n_classes,)
    fcw_all = jnp.zeros((ncol, nout), jnp.float32)
    fcw_all = fcw_all.at[:feat_dim, :n_classes].set(fcw.T).astype(jnp.bfloat16)
    fcb_all = jnp.full((1, nout), -1e30, jnp.float32).at[0, :n_classes].set(fcb)

    return {
        "table_pad": table_pad, "w_all": w_all, "bias_all": bias_all,
        "mask": mask, "fcw_all": fcw_all, "fcb_all": fcb_all,
        "dims": dict(V=V, E=E, e_pad=e_pad, K=K, ncol=ncol, nout=nout,
                     maxk=maxk, L=L, n_classes=n_classes),
    }


def _pick_batch_tile(B, L, max_rows=4096):
    """Largest rows-per-step <= max_rows, preferring >=2 grid steps (v7x TCs)."""
    cands = [bt for bt in range(1, B + 1) if B % bt == 0 and (bt * L) % 8 == 0]
    assert cands, "no valid batch tile"
    multi = [bt for bt in cands if B // bt >= 2]
    pool = multi if multi else cands
    ok = [bt for bt in pool if bt * L <= max_rows]
    return max(ok) if ok else min(pool)


# --------------------------------------------------------------------------- #
# Forward
# --------------------------------------------------------------------------- #
def textcnn_forward(tokens, packed, *, batch_tile=None, leaky_slope=0.01):
    B, L = tokens.shape
    d = packed["dims"]
    assert L == d["L"]
    e_pad, K, ncol, nout, maxk = d["e_pad"], d["K"], d["ncol"], d["nout"], d["maxk"]
    n_classes = d["n_classes"]

    if batch_tile is None:
        batch_tile = _pick_batch_tile(B, L)
    assert B % batch_tile == 0 and (batch_tile * L) % 8 == 0
    rows = batch_tile * L
    grid = (B // batch_tile,)

    # im2col via the (bf16) embedding gather; tap shift folded into the gather.
    # Clamped positions never land in a live (w!=0, unmasked) slot -- see packer.
    pos = jnp.minimum(jnp.arange(L)[:, None] + jnp.arange(maxk)[None, :], L - 1)
    tok_taps = tokens[:, pos]                                   # (B, L, maxk)
    x = packed["table_pad"][tok_taps].reshape(B * L, K)         # bf16

    kernel = functools.partial(_textcnn_kernel, batch_tile=batch_tile,
                               seq_len=L, leaky_slope=leaky_slope)

    flops = 2 * (B * L) * K * ncol + 2 * B * ncol * nout
    bytes_accessed = (x.size * 2 + packed["w_all"].size * 2
                      + packed["fcw_all"].size * 2
                      + (packed["bias_all"].size + packed["mask"].size
                         + packed["fcb_all"].size) * 4
                      + B * nout * 4)
    cost = pl.CostEstimate(flops=flops, transcendentals=B * nout,
                           bytes_accessed=bytes_accessed)

    # Explicit VMEM budget: double-buffered activations/outputs, single-buffered
    # constants, 2x headroom + 4 MiB slack.  Keeps the tiling portable to v7x.
    vmem_bytes = (2 * rows * K * 2                 # x (bf16, double-buffered)
                  + K * ncol * 2                   # conv weights (bf16)
                  + ncol * 4 + L * ncol * 4        # conv bias + time mask (f32)
                  + ncol * nout * 2 + nout * 4     # fc weights (bf16) + bias
                  + 2 * batch_tile * nout * 4      # output (f32, double-buffered)
                  + rows * ncol * 4)               # in-kernel f32 intermediates
    vmem_limit = min(2 * int(vmem_bytes) + (4 << 20), 64 << 20)

    def build_call(single_buffer_consts):
        ckw = dict(pipeline_mode=pl.Buffered(1)) if single_buffer_consts else {}
        in_specs = [
            pl.BlockSpec((rows, K), lambda i: (i, 0)),          # im2col rows
            pl.BlockSpec((K, ncol), lambda i: (0, 0), **ckw),   # conv weights
            pl.BlockSpec((1, ncol), lambda i: (0, 0), **ckw),   # conv bias
            pl.BlockSpec((L, ncol), lambda i: (0, 0), **ckw),   # time mask
            pl.BlockSpec((ncol, nout), lambda i: (0, 0), **ckw),  # fc weights
            pl.BlockSpec((1, nout), lambda i: (0, 0), **ckw),   # fc bias
        ]
        return pl.pallas_call(
            kernel,
            grid=grid,
            in_specs=in_specs,
            out_specs=pl.BlockSpec((batch_tile, nout), lambda i: (i, 0)),
            out_shape=jax.ShapeDtypeStruct((B, nout), jnp.float32),
            compiler_params=pltpu.CompilerParams(
                dimension_semantics=("parallel",),
                vmem_limit_bytes=vmem_limit),
            cost_estimate=cost,
        )

    args = (x, packed["w_all"], packed["bias_all"], packed["mask"],
            packed["fcw_all"], packed["fcb_all"])
    try:
        out = jax.block_until_ready(build_call(True)(*args))
    except Exception:
        # Fallback if this JAX build rejects single-buffered constant operands.
        out = jax.block_until_ready(build_call(False)(*args))

    return out[:, :n_classes]


# --------------------------------------------------------------------------- #
# Pure-JAX reference (mirrors the PyTorch forward, classification path)
# --------------------------------------------------------------------------- #
def reference_forward(tokens, params, kernel_sizes, max_length, leaky_slope=0.01):
    emb = jnp.take(params["embedding"], tokens, axis=0).astype(jnp.float32)
    feats = []
    for k in kernel_sizes:
        w = params[f"conv{k}_w"]
        b = params[f"conv{k}_b"]
        P = max_length - k + 1
        acc = 0.0
        for i in range(k):
            acc = acc + jnp.einsum("bpe,ce->bpc", emb[:, i:i + P, :], w[:, i, :])
        conv = acc + b[None, None, :]
        act = jnp.where(conv > 0, conv, leaky_slope * conv)
        feats.append(jnp.max(act, axis=1))
    feat = jnp.concatenate(feats, axis=1)
    logits = feat @ params["fc_w"].T + params["fc_b"]
    return jax.nn.softmax(logits, axis=1)


if __name__ == "__main__":
    # Small, deterministic config (task='classification').
    B, L, E = 16, 16, 50         # batch, max_length, embedding_size
    V = 100                      # n_vocabulary
    C = 8                        # channel_num
    KERNEL_SIZES = (2, 3, 4)     # kernal_size

    key = jax.random.PRNGKey(0)
    keys = jax.random.split(key, 4 + 2 * len(KERNEL_SIZES))

    params = {
        "embedding": 0.1 * jax.random.normal(keys[0], (V, E), jnp.float32),
        "fc_w": 0.1 * jax.random.normal(keys[1], (5, C * len(KERNEL_SIZES)),
                                        jnp.float32),
        "fc_b": 0.1 * jax.random.normal(keys[2], (5,), jnp.float32),
    }
    for j, k in enumerate(KERNEL_SIZES):
        params[f"conv{k}_w"] = 0.1 * jax.random.normal(
            keys[3 + 2 * j], (C, k, E), jnp.float32)
        params[f"conv{k}_b"] = 0.1 * jax.random.normal(
            keys[4 + 2 * j], (C,), jnp.float32)

    tokens = jax.random.randint(keys[-1], (B, L), 0, V, dtype=jnp.int32)

    # Pack weights ONCE (out of the per-call path), then run the fused forward.
    packed = pack_textcnn_params(params, KERNEL_SIZES, L, channel_num=C)
    out = textcnn_forward(tokens, packed)
    out = jax.block_until_ready(out)

    ref = reference_forward(tokens, params, KERNEL_SIZES, L)
    assert out.shape == (B, 5)
    assert bool(jnp.all(jnp.isfinite(out)))
    # bf16 matmul operands + approx reciprocal -> relaxed tolerance vs f32 ref.
    assert jnp.allclose(out, ref, rtol=3e-2, atol=5e-3), (
        f"mismatch vs reference: max abs diff {jnp.max(jnp.abs(out - ref))}")

    print("KERNEL_OK")
</pallas_src>

<mosaic_0001>
module attributes {stable_mosaic.version = 11 : i64} {
  func.func @_textcnn_kernel(%arg0: i32, %arg1: memref<128x256xbf16, #tpu.memory_space<vmem>>, %arg2: memref<256x128xbf16, #tpu.memory_space<vmem>>, %arg3: memref<1x128xf32, #tpu.memory_space<vmem>>, %arg4: memref<16x128xf32, #tpu.memory_space<vmem>>, %arg5: memref<128x128xbf16, #tpu.memory_space<vmem>>, %arg6: memref<1x128xf32, #tpu.memory_space<vmem>>, %arg7: memref<8x128xf32, #tpu.memory_space<vmem>>) attributes {dimension_semantics = [#tpu.dimension_semantics<parallel>], iteration_bounds = array<i64: 2>, scalar_prefetch = 0 : i64, scratch_operands = 0 : i64, tpu.core_type = #tpu.core_type<tc>, window_params = [{transform_indices = @transform_0, window_bounds = array<i64: 128, 256>}, {pipeline_mode = #tpu.pipeline_mode<synchronous>, transform_indices = @transform_1, window_bounds = array<i64: 256, 128>}, {pipeline_mode = #tpu.pipeline_mode<synchronous>, transform_indices = @transform_2, window_bounds = array<i64: 1, 128>}, {pipeline_mode = #tpu.pipeline_mode<synchronous>, transform_indices = @transform_3, window_bounds = array<i64: 16, 128>}, {pipeline_mode = #tpu.pipeline_mode<synchronous>, transform_indices = @transform_4, window_bounds = array<i64: 128, 128>}, {pipeline_mode = #tpu.pipeline_mode<synchronous>, transform_indices = @transform_5, window_bounds = array<i64: 1, 128>}, {transform_indices = @transform_6, window_bounds = array<i64: 8, 128>}]} {
    %c0 = arith.constant 0 : index
    %c0_0 = arith.constant 0 : index
    %0 = vector.load %arg1[%c0, %c0_0] : memref<128x256xbf16, #tpu.memory_space<vmem>>, vector<128x256xbf16>
    %c0_1 = arith.constant 0 : index
    %c0_2 = arith.constant 0 : index
    %1 = vector.load %arg2[%c0_1, %c0_2] : memref<256x128xbf16, #tpu.memory_space<vmem>>, vector<256x128xbf16>
    %cst = arith.constant dense<0.000000e+00> : vector<128x128xf32>
    %2 = tpu.matmul %0, %1, %cst {dimension_numbers = #tpu.dot_dimension_numbers<[1], [0], [0], [1], [0, 0, 1, 1], [], []>} : vector<128x256xbf16>, vector<256x128xbf16>, vector<128x128xf32> -> vector<128x128xf32>
    %c0_3 = arith.constant 0 : index
    %c0_4 = arith.constant 0 : index
    %3 = vector.load %arg3[%c0_3, %c0_4] : memref<1x128xf32, #tpu.memory_space<vmem>>, vector<1x128xf32>
    %4 = vector.broadcast %3 : vector<1x128xf32> to vector<128x128xf32>
    %5 = arith.addf %2, %4 : vector<128x128xf32>
    %cst_5 = arith.constant 0.00999999977 : f32
    %6 = vector.broadcast %cst_5 : f32 to vector<128x128xf32>
    %7 = arith.mulf %6, %5 : vector<128x128xf32>
    %8 = arith.maximumf %5, %7 : vector<128x128xf32>
    %9 = vector.shape_cast %8 : vector<128x128xf32> to vector<8x16x128xf32>
    %c0_6 = arith.constant 0 : index
    %c0_7 = arith.constant 0 : index
    %10 = vector.load %arg4[%c0_6, %c0_7] : memref<16x128xf32, #tpu.memory_space<vmem>>, vector<16x128xf32>
    %11 = vector.shape_cast %10 : vector<16x128xf32> to vector<1x16x128xf32>
    %12 = vector.broadcast %11 : vector<1x16x128xf32> to vector<8x16x128xf32>
    %13 = arith.addf %9, %12 : vector<8x16x128xf32>
    %cst_8 = arith.constant dense<0xFF800000> : vector<8x128xf32>
    %14 = vector.multi_reduction <maximumf>, %13, %cst_8 [1] : vector<8x16x128xf32> to vector<8x128xf32>
    %15 = arith.truncf %14 : vector<8x128xf32> to vector<8x128xbf16>
    %c0_9 = arith.constant 0 : index
    %c0_10 = arith.constant 0 : index
    %16 = vector.load %arg5[%c0_9, %c0_10] : memref<128x128xbf16, #tpu.memory_space<vmem>>, vector<128x128xbf16>
    %cst_11 = arith.constant dense<0.000000e+00> : vector<8x128xf32>
    %17 = tpu.matmul %15, %16, %cst_11 {dimension_numbers = #tpu.dot_dimension_numbers<[1], [0], [0], [1], [0, 0, 1, 1], [], []>} : vector<8x128xbf16>, vector<128x128xbf16>, vector<8x128xf32> -> vector<8x128xf32>
    %c0_12 = arith.constant 0 : index
    %c0_13 = arith.constant 0 : index
    %18 = vector.load %arg6[%c0_12, %c0_13] : memref<1x128xf32, #tpu.memory_space<vmem>>, vector<1x128xf32>
    %19 = vector.broadcast %18 : vector<1x128xf32> to vector<8x128xf32>
    %20 = arith.addf %17, %19 : vector<8x128xf32>
    %cst_14 = arith.constant dense<0xFF800000> : vector<8xf32>
    %21 = vector.multi_reduction <maximumf>, %20, %cst_14 [1] : vector<8x128xf32> to vector<8xf32>
    %22 = vector.shape_cast %21 : vector<8xf32> to vector<8x1xf32>
    %23 = vector.broadcast %22 : vector<8x1xf32> to vector<8x128xf32>
    %24 = arith.subf %20, %23 : vector<8x128xf32>
    %25 = math.exp %24 : vector<8x128xf32>
    %cst_15 = arith.constant dense<0.000000e+00> : vector<8xf32>
    %26 = vector.multi_reduction <add>, %25, %cst_15 [1] : vector<8x128xf32> to vector<8xf32>
    %27 = vector.shape_cast %26 : vector<8xf32> to vector<8x1xf32>
    %28 = tpu.reciprocal %27 {approx = true} : vector<8x1xf32> -> vector<8x1xf32>
    %29 = vector.broadcast %28 : vector<8x1xf32> to vector<8x128xf32>
    %30 = arith.mulf %25, %29 : vector<8x128xf32>
    %c0_16 = arith.constant 0 : index
    %c0_17 = arith.constant 0 : index
    %31 = vector.load %arg7[%c0_16, %c0_17] : memref<8x128xf32, #tpu.memory_space<vmem>>, vector<8x128xf32>
    tpu.vector_store %arg7[%c0_16, %c0_17], %30 {strides = array<i32>} : memref<8x128xf32, #tpu.memory_space<vmem>>, vector<8x128xf32>,
    return
  }
  func.func @transform_0(%arg0: i32) -> (i32, i32) {
    %c0_i32 = arith.constant 0 : i32
    %c0_i32_0 = arith.constant 0 : i32
    return %arg0, %c0_i32 : i32, i32
  }
  func.func @transform_1(%arg0: i32) -> (i32, i32) {
    %c0_i32 = arith.constant 0 : i32
    %c0_i32_0 = arith.constant 0 : i32
    %c0_i32_1 = arith.constant 0 : i32
    return %c0_i32, %c0_i32_0 : i32, i32
  }
  func.func @transform_2(%arg0: i32) -> (i32, i32) {
    %c0_i32 = arith.constant 0 : i32
    %c0_i32_0 = arith.constant 0 : i32
    %c0_i32_1 = arith.constant 0 : i32
    return %c0_i32, %c0_i32_0 : i32, i32
  }
  func.func @transform_3(%arg0: i32) -> (i32, i32) {
    %c0_i32 = arith.constant 0 : i32
    %c0_i32_0 = arith.constant 0 : i32
    %c0_i32_1 = arith.constant 0 : i32
    return %c0_i32, %c0_i32_0 : i32, i32
  }
  func.func @transform_4(%arg0: i32) -> (i32, i32) {
    %c0_i32 = arith.constant 0 : i32
    %c0_i32_0 = arith.constant 0 : i32
    %c0_i32_1 = arith.constant 0 : i32
    return %c0_i32, %c0_i32_0 : i32, i32
  }
  func.func @transform_5(%arg0: i32) -> (i32, i32) {
    %c0_i32 = arith.constant 0 : i32
    %c0_i32_0 = arith.constant 0 : i32
    %c0_i32_1 = arith.constant 0 : i32
    return %c0_i32, %c0_i32_0 : i32, i32
  }
  func.func @transform_6(%arg0: i32) -> (i32, i32) {
    %c0_i32 = arith.constant 0 : i32
    %c0_i32_0 = arith.constant 0 : i32
    return %arg0, %c0_i32 : i32, i32
  }
}

module attributes {stable_mosaic.version = 11 : i64} {
  func.func @_textcnn_kernel(%arg0: i32, %arg1: memref<128x256xbf16, #tpu.memory_space<vmem>>, %arg2: memref<256x128xbf16, #tpu.memory_space<vmem>>, %arg3: memref<1x128xf32, #tpu.memory_space<vmem>>, %arg4: memref<16x128xf32, #tpu.memory_space<vmem>>, %arg5: memref<128x128xbf16, #tpu.memory_space<vmem>>, %arg6: memref<1x128xf32, #tpu.memory_space<vmem>>, %arg7: memref<8x128xf32, #tpu.memory_space<vmem>>) attributes {dimension_semantics = [#tpu.dimension_semantics<parallel>], iteration_bounds = array<i64: 2>, scalar_prefetch = 0 : i64, scratch_operands = 0 : i64, tpu.core_type = #tpu.core_type<tc>, window_params = [{transform_indices = @transform_0, window_bounds = array<i64: 128, 256>}, {pipeline_mode = #tpu.pipeline_mode<synchronous>, transform_indices = @transform_1, window_bounds = array<i64: 256, 128>}, {pipeline_mode = #tpu.pipeline_mode<synchronous>, transform_indices = @transform_2, window_bounds = array<i64: 1, 128>}, {pipeline_mode = #tpu.pipeline_mode<synchronous>, transform_indices = @transform_3, window_bounds = array<i64: 16, 128>}, {pipeline_mode = #tpu.pipeline_mode<synchronous>, transform_indices = @transform_4, window_bounds = array<i64: 128, 128>}, {pipeline_mode = #tpu.pipeline_mode<synchronous>, transform_indices = @transform_5, window_bounds = array<i64: 1, 128>}, {transform_indices = @transform_6, window_bounds = array<i64: 8, 128>}]} {
    %c0 = arith.constant 0 : index
    %c0_0 = arith.constant 0 : index
    %0 = vector.load %arg1[%c0, %c0_0] : memref<128x256xbf16, #tpu.memory_space<vmem>>, vector<128x256xbf16>
    %c0_1 = arith.constant 0 : index
    %c0_2 = arith.constant 0 : index
    %1 = vector.load %arg2[%c0_1, %c0_2] : memref<256x128xbf16, #tpu.memory_space<vmem>>, vector<256x128xbf16>
    %cst = arith.constant dense<0.000000e+00> : vector<128x128xf32>
    %2 = tpu.matmul %0, %1, %cst {dimension_numbers = #tpu.dot_dimension_numbers<[1], [0], [0], [1], [0, 0, 1, 1], [], []>} : vector<128x256xbf16>, vector<256x128xbf16>, vector<128x128xf32> -> vector<128x128xf32>
    %c0_3 = arith.constant 0 : index
    %c0_4 = arith.constant 0 : index
    %3 = vector.load %arg3[%c0_3, %c0_4] : memref<1x128xf32, #tpu.memory_space<vmem>>, vector<1x128xf32>
    %4 = vector.broadcast %3 : vector<1x128xf32> to vector<128x128xf32>
    %5 = arith.addf %2, %4 : vector<128x128xf32>
    %cst_5 = arith.constant 0.00999999977 : f32
    %6 = vector.broadcast %cst_5 : f32 to vector<128x128xf32>
    %7 = arith.mulf %6, %5 : vector<128x128xf32>
    %8 = arith.maximumf %5, %7 : vector<128x128xf32>
    %9 = vector.shape_cast %8 : vector<128x128xf32> to vector<8x16x128xf32>
    %c0_6 = arith.constant 0 : index
    %c0_7 = arith.constant 0 : index
    %10 = vector.load %arg4[%c0_6, %c0_7] : memref<16x128xf32, #tpu.memory_space<vmem>>, vector<16x128xf32>
    %11 = vector.shape_cast %10 : vector<16x128xf32> to vector<1x16x128xf32>
    %12 = vector.broadcast %11 : vector<1x16x128xf32> to vector<8x16x128xf32>
    %13 = arith.addf %9, %12 : vector<8x16x128xf32>
    %cst_8 = arith.constant dense<0xFF800000> : vector<8x128xf32>
    %14 = vector.multi_reduction <maximumf>, %13, %cst_8 [1] : vector<8x16x128xf32> to vector<8x128xf32>
    %15 = arith.truncf %14 : vector<8x128xf32> to vector<8x128xbf16>
    %c0_9 = arith.constant 0 : index
    %c0_10 = arith.constant 0 : index
    %16 = vector.load %arg5[%c0_9, %c0_10] : memref<128x128xbf16, #tpu.memory_space<vmem>>, vector<128x128xbf16>
    %cst_11 = arith.constant dense<0.000000e+00> : vector<8x128xf32>
    %17 = tpu.matmul %15, %16, %cst_11 {dimension_numbers = #tpu.dot_dimension_numbers<[1], [0], [0], [1], [0, 0, 1, 1], [], []>} : vector<8x128xbf16>, vector<128x128xbf16>, vector<8x128xf32> -> vector<8x128xf32>
    %c0_12 = arith.constant 0 : index
    %c0_13 = arith.constant 0 : index
    %18 = vector.load %arg6[%c0_12, %c0_13] : memref<1x128xf32, #tpu.memory_space<vmem>>, vector<1x128xf32>
    %19 = vector.broadcast %18 : vector<1x128xf32> to vector<8x128xf32>
    %20 = arith.addf %17, %19 : vector<8x128xf32>
    %cst_14 = arith.constant dense<0xFF800000> : vector<8xf32>
    %21 = vector.multi_reduction <maximumf>, %20, %cst_14 [1] : vector<8x128xf32> to vector<8xf32>
    %22 = vector.shape_cast %21 : vector<8xf32> to vector<8x1xf32>
    %23 = vector.broadcast %22 : vector<8x1xf32> to vector<8x128xf32>
    %24 = arith.subf %20, %23 : vector<8x128xf32>
    %25 = math.exp %24 : vector<8x128xf32>
    %cst_15 = arith.constant dense<0.000000e+00> : vector<8xf32>
    %26 = vector.multi_reduction <add>, %25, %cst_15 [1] : vector<8x128xf32> to vector<8xf32>
    %27 = vector.shape_cast %26 : vector<8xf32> to vector<8x1xf32>
    %28 = tpu.reciprocal %27 {approx = true} : vector<8x1xf32> -> vector<8x1xf32>
    %29 = vector.broadcast %28 : vector<8x1xf32> to vector<8x128xf32>
    %30 = arith.mulf %25, %29 : vector<8x128xf32>
    %c0_16 = arith.constant 0 : index
    %c0_17 = arith.constant 0 : index
    %31 = vector.load %arg7[%c0_16, %c0_17] : memref<8x128xf32, #tpu.memory_space<vmem>>, vector<8x128xf32>
    tpu.vector_store %arg7[%c0_16, %c0_17], %30 {strides = array<i32>} : memref<8x128xf32, #tpu.memory_space<vmem>>, vector<8x128xf32>,
    return
  }
  func.func @transform_0(%arg0: i32) -> (i32, i32) {
    %c0_i32 = arith.constant 0 : i32
    %c0_i32_0 = arith.constant 0 : i32
    return %arg0, %c0_i32 : i32, i32
  }
  func.func @transform_1(%arg0: i32) -> (i32, i32) {
    %c0_i32 = arith.constant 0 : i32
    %c0_i32_0 = arith.constant 0 : i32
    %c0_i32_1 = arith.constant 0 : i32
    return %c0_i32, %c0_i32_0 : i32, i32
  }
  func.func @transform_2(%arg0: i32) -> (i32, i32) {
    %c0_i32 = arith.constant 0 : i32
    %c0_i32_0 = arith.constant 0 : i32
    %c0_i32_1 = arith.constant 0 : i32
    return %c0_i32, %c0_i32_0 : i32, i32
  }
  func.func @transform_3(%arg0: i32) -> (i32, i32) {
    %c0_i32 = arith.constant 0 : i32
    %c0_i32_0 = arith.constant 0 : i32
    %c0_i32_1 = arith.constant 0 : i32
    return %c0_i32, %c0_i32_0 : i32, i32
  }
  func.func @transform_4(%arg0: i32) -> (i32, i32) {
    %c0_i32 = arith.constant 0 : i32
    %c0_i32_0 = arith.constant 0 : i32
    %c0_i32_1 = arith.constant 0 : i32
    return %c0_i32, %c0_i32_0 : i32, i32
  }
  func.func @transform_5(%arg0: i32) -> (i32, i32) {
    %c0_i32 = arith.constant 0 : i32
    %c0_i32_0 = arith.constant 0 : i32
    %c0_i32_1 = arith.constant 0 : i32
    return %c0_i32, %c0_i32_0 : i32, i32
  }
  func.func @transform_6(%arg0: i32) -> (i32, i32) {
    %c0_i32 = arith.constant 0 : i32
    %c0_i32_0 = arith.constant 0 : i32
    return %arg0, %c0_i32 : i32, i32
  }
}

</mosaic_0001>

<llo_original>
// kernel: tpu_custom_call.1
$region0: #{tpu_custom_call.1}
  #allocation0 [shape = 'u32[]', space=smem, size = 0x4, offset = 0x4, fixed_abs, tag = 'smem constant byte address 0x4 - core index']
  #allocation1 [shape = 'u32[144,128]{1,0:T(1,128)}', space=vmem, size = 0x12000, scoped, tag = 'internal scratch']
  %s0 = inlined_call_operand.hbm [shape: bf16[256,256], index: 0, kind: input, shape index: {}]
  %s1 = inlined_call_operand.hbm [shape: bf16[256,128], index: 1, kind: input, shape index: {}]
  %s2 = inlined_call_operand.vmem [shape: f32[1,128], index: 2, kind: input, shape index: {}]
  %s3 = inlined_call_operand.hbm [shape: f32[16,128], index: 3, kind: input, shape index: {}]
  %s4 = inlined_call_operand.hbm [shape: bf16[128,128], index: 4, kind: input, shape index: {}]
  %s5 = inlined_call_operand.vmem [shape: f32[1,128], index: 5, kind: input, shape index: {}]
  %s6 = inlined_call_operand.hbm [shape: f32[16,128], index: 6, kind: output, shape index: {}]
  %s7 = sld [smem:[#allocation0]]
  $region73: #{tpu_custom_call.1} parent=0
    _
  %s9 = ssub.s32 1, %s7
  %s10 = scalar_select 0, %s9, %s7
  $region1: #{tpu_custom_call.1} parent=0
    #allocation2 [shape = 'u8[131072]{0}', space=vmem, size = 0x20000, scoped, tag = 'input window, operand 0']
    #allocation3 [shape = 's32[2]{0}', space=sflag, size = 0x8, scoped, tag = 'scoped memory for tpu_custom_call.1']
    #allocation4 [shape = 's32[2]{0}', space=sflag, size = 0x8, scoped, tag = 'scoped memory for tpu_custom_call.1']
    #allocation5 [shape = 'u8[65536]{0}', space=vmem, size = 0x10000, scoped, tag = 'input window, operand 1, single buffered']
    #allocation6 [shape = 's32[1]{0}', space=sflag, size = 0x4, scoped, tag = 'scoped memory for tpu_custom_call.1']
    #allocation7 [shape = 'u8[8192]{0}', space=vmem, size = 0x2000, scoped, tag = 'input window, operand 3, single buffered']
    #allocation8 [shape = 'u8[32768]{0}', space=vmem, size = 0x8000, scoped, tag = 'input window, operand 4, single buffered']
    #allocation9 [shape = 's32[1]{0}', space=sflag, size = 0x4, scoped, tag = 'scoped memory for tpu_custom_call.1']
    #allocation10 [shape = 'u8[8192]{0}', space=vmem, size = 0x2000, scoped, tag = 'output window, operand 0']
    %11 = vsyncpa [#allocation3], 0
    %s12 = scalar_lea.sflag [#allocation3], 1
    %13 = vsyncpa %s12, 0
    %14 = vsyncpa [#allocation6], 0
    %15 = vsyncpa [#allocation9], 0
    %16 = vsyncpa [#allocation4], 0
    %s17 = scalar_lea.sflag [#allocation4], 1
    %18 = vsyncpa %s17, 0
    loop: start=0, step=1, limit=4
    $region2: #{tpu_custom_call.1} parent=1 // loop_pre_header
      _
    $region3: #{tpu_custom_call.1} parent=1 // loop_header
      %s20 = sphi 0, %s24
      %p21 = scmp.ge.s32.totalorder %s20, 4
      %s30 = sphi 0, %s32
      %s33 = sphi 0, %s30
      %s34 = sphi 0, %s33
      %s50 = sphi 0, %s34
      %s54 = sphi 0, %s54
      %s56 = sphi 0, %s54
      %s57 = sphi 0, %s56
      %s71 = sphi 0, %s57
      %s75 = sphi 0, %s75
      %s77 = sphi 0, %s75
      %s78 = sphi 0, %s77
      %s92 = sphi 0, %s78
      %s96 = sphi 0, %s96
      %s98 = sphi 0, %s96
      %s99 = sphi 0, %s98
      %s113 = sphi 0, %s99
      %s117 = sphi 0, %s117
      %s119 = sphi 0, %s117
      %s120 = sphi 0, %s119
      %s134 = sphi 0, %s120
      %s138 = sphi 0, %s138
      %s140 = sphi 0, %s138
      %s141 = sphi 0, %s140
      %s155 = sphi 0, %s141
      %s161 = sphi 0, %s163
      %s164 = sphi 0, %s161
      %s165 = sphi 0, %s164
      %s181 = sphi 0, %s165
    $region4: #{tpu_custom_call.1} parent=1 // loop_header_branch
      %23 = sbr.rel (%p21) target = $region8
    $region5: #{tpu_custom_call.1} parent=1 // loop_body
      %s25 = ssub.s32 %s20, 1
      %s26 = ssub.s32 %s20, 2
      %s27 = sadd.s32 %s20, 1
      %s28 = ssub.s32 %s20, %s27
      %p29 = scmp.eq.s32.totalorder %s28, 0
      %s31 = sadd.s32 %s30, 1
      %s32 = scalar_select %p29, %s30, %s31
      %p35 = pneg %p29
      %p36 = scmp.eq.s32.totalorder %s20, 1
      %p37 = por %p35, %p36
      %p38 = scmp.ne.s32.totalorder %s30, %s33
      %p39 = scmp.eq.s32.totalorder %s20, 0
      %p40 = por %p38, %p39
      %p41 = scmp.ne.s32.totalorder %s30, %s33
      %p42 = scmp.eq.s32.totalorder %s25, 1
      %p43 = por %p41, %p42
      %p44 = scmp.ne.s32.totalorder %s33, %s34
      %p45 = scmp.eq.s32.totalorder %s25, 0
      %p46 = por %p44, %p45
      %p47 = scmp.ne.s32.totalorder %s33, %s34
      %p48 = scmp.eq.s32.totalorder %s26, 1
      %p49 = por %p47, %p48
      %p51 = scmp.ne.s32.totalorder %s34, %s50
      %p52 = scmp.eq.s32.totalorder %s26, 0
      %p53 = por %p51, %p52
      %s55 = sadd.s32 %s54, 1
      %p58 = scmp.eq.s32.totalorder %s20, 1
      %p59 = scmp.ne.s32.totalorder %s54, %s56
      %p60 = scmp.eq.s32.totalorder %s20, 0
      %p61 = por %p59, %p60
      %p62 = scmp.ne.s32.totalorder %s54, %s56
      %p63 = scmp.eq.s32.totalorder %s25, 1
      %p64 = por %p62, %p63
      %p65 = scmp.ne.s32.totalorder %s56, %s57
      %p66 = scmp.eq.s32.totalorder %s25, 0
      %p67 = por %p65, %p66
      %p68 = scmp.ne.s32.totalorder %s56, %s57
      %p69 = scmp.eq.s32.totalorder %s26, 1
      %p70 = por %p68, %p69
      %p72 = scmp.ne.s32.totalorder %s57, %s71
      %p73 = scmp.eq.s32.totalorder %s26, 0
      %p74 = por %p72, %p73
      %s76 = sadd.s32 %s75, 1
      %p79 = scmp.eq.s32.totalorder %s20, 1
      %p80 = scmp.ne.s32.totalorder %s75, %s77
      %p81 = scmp.eq.s32.totalorder %s20, 0
      %p82 = por %p80, %p81
      %p83 = scmp.ne.s32.totalorder %s75, %s77
      %p84 = scmp.eq.s32.totalorder %s25, 1
      %p85 = por %p83, %p84
      %p86 = scmp.ne.s32.totalorder %s77, %s78
      %p87 = scmp.eq.s32.totalorder %s25, 0
      %p88 = por %p86, %p87
      %p89 = scmp.ne.s32.totalorder %s77, %s78
      %p90 = scmp.eq.s32.totalorder %s26, 1
      %p91 = por %p89, %p90
      %p93 = scmp.ne.s32.totalorder %s78, %s92
      %p94 = scmp.eq.s32.totalorder %s26, 0
      %p95 = por %p93, %p94
      %s97 = sadd.s32 %s96, 1
      %p100 = scmp.eq.s32.totalorder %s20, 1
      %p101 = scmp.ne.s32.totalorder %s96, %s98
      %p102 = scmp.eq.s32.totalorder %s20, 0
      %p103 = por %p101, %p102
      %p104 = scmp.ne.s32.totalorder %s96, %s98
      %p105 = scmp.eq.s32.totalorder %s25, 1
      %p106 = por %p104, %p105
      %p107 = scmp.ne.s32.totalorder %s98, %s99
      %p108 = scmp.eq.s32.totalorder %s25, 0
      %p109 = por %p107, %p108
      %p110 = scmp.ne.s32.totalorder %s98, %s99
      %p111 = scmp.eq.s32.totalorder %s26, 1
      %p112 = por %p110, %p111
      %p114 = scmp.ne.s32.totalorder %s99, %s113
      %p115 = scmp.eq.s32.totalorder %s26, 0
      %p116 = por %p114, %p115
      %s118 = sadd.s32 %s117, 1
      %p121 = scmp.eq.s32.totalorder %s20, 1
      %p122 = scmp.ne.s32.totalorder %s117, %s119
      %p123 = scmp.eq.s32.totalorder %s20, 0
      %p124 = por %p122, %p123
      %p125 = scmp.ne.s32.totalorder %s117, %s119
      %p126 = scmp.eq.s32.totalorder %s25, 1
      %p127 = por %p125, %p126
      %p128 = scmp.ne.s32.totalorder %s119, %s120
      %p129 = scmp.eq.s32.totalorder %s25, 0
      %p130 = por %p128, %p129
      %p131 = scmp.ne.s32.totalorder %s119, %s120
      %p132 = scmp.eq.s32.totalorder %s26, 1
      %p133 = por %p131, %p132
      %p135 = scmp.ne.s32.totalorder %s120, %s134
      %p136 = scmp.eq.s32.totalorder %s26, 0
      %p137 = por %p135, %p136
      %s139 = sadd.s32 %s138, 1
      %p142 = scmp.eq.s32.totalorder %s20, 1
      %p143 = scmp.ne.s32.totalorder %s138, %s140
      %p144 = scmp.eq.s32.totalorder %s20, 0
      %p145 = por %p143, %p144
      %p146 = scmp.ne.s32.totalorder %s138, %s140
      %p147 = scmp.eq.s32.totalorder %s25, 1
      %p148 = por %p146, %p147
      %p149 = scmp.ne.s32.totalorder %s140, %s141
      %p150 = scmp.eq.s32.totalorder %s25, 0
      %p151 = por %p149, %p150
      %p152 = scmp.ne.s32.totalorder %s140, %s141
      %p153 = scmp.eq.s32.totalorder %s26, 1
      %p154 = por %p152, %p153
      %p156 = scmp.ne.s32.totalorder %s141, %s155
      %p157 = scmp.eq.s32.totalorder %s26, 0
      %p158 = por %p156, %p157
      %s159 = ssub.s32 %s20, %s27
      %p160 = scmp.eq.s32.totalorder %s159, 0
      %s162 = sadd.s32 %s161, 1
      %s163 = scalar_select %p160, %s161, %s162
      %p166 = pneg %p160
      %p167 = scmp.eq.s32.totalorder %s20, 1
      %p168 = por %p166, %p167
      %p169 = scmp.ne.s32.totalorder %s161, %s164
      %p170 = scmp.eq.s32.totalorder %s20, 0
      %p171 = por %p169, %p170
      %p172 = scmp.ne.s32.totalorder %s161, %s164
      %p173 = scmp.eq.s32.totalorder %s25, 1
      %p174 = por %p172, %p173
      %p175 = scmp.ne.s32.totalorder %s164, %s165
      %p176 = scmp.eq.s32.totalorder %s25, 0
      %p177 = por %p175, %p176
      %p178 = scmp.ne.s32.totalorder %s164, %s165
      %p179 = scmp.eq.s32.totalorder %s26, 1
      %p180 = por %p178, %p179
      %p182 = scmp.ne.s32.totalorder %s165, %s181
      %p183 = scmp.eq.s32.totalorder %s26, 0
      %p184 = por %p182, %p183
      %p185 = scmp.le.s32.totalorder 1, %s20
      %p186 = scmp.lt.s32.totalorder %s20, 3
      %p187 = pnand %p185, %p186
      %p188 = pneg %p187
      // Predicated region
      $region9: #{tpu_custom_call.1} parent=5 // pred_check
        _
      $region10: #{tpu_custom_call.1} parent=5 // pred_check_branch
        %190 = sbr.rel (%p187) target = $region12
      $region11: #{tpu_custom_call.1} parent=5 // pred_region
        %s191 = ssub.s32 %s20, 1
        // Predicated region
        $region13: #{tpu_custom_call.1} parent=11 // pred_check
          %p192 = pneg %p67
        $region14: #{tpu_custom_call.1} parent=11 // pred_check_branch
          %194 = sbr.rel (%p192) target = $region16
        $region15: #{tpu_custom_call.1} parent=11 // pred_region
          %s196 = ssub.s32 2048, 2048
          %197 = vsyncadd [#allocation6], %s196
          %s198 = sshll.u32 [#allocation5], 4
          %s199 = int_to_ptr.vmem [resolvable:$true] %s198
          %204 = dma.hbm_to_vmem [thread:$0]  %s1, 2048, %s199, [#allocation6], 64, 64, 4
        $region16: #{tpu_custom_call.1} parent=11 // pred_fallthru
          _
        // Predicated region
        $region17: #{tpu_custom_call.1} parent=11 // pred_check
          %p205 = pneg %p88
        $region18: #{tpu_custom_call.1} parent=11 // pred_check_branch
          %207 = sbr.rel (%p205) target = $region20
        $region19: #{tpu_custom_call.1} parent=11 // pred_region
          _
        $region20: #{tpu_custom_call.1} parent=11 // pred_fallthru
          _
        // Predicated region
        $region21: #{tpu_custom_call.1} parent=11 // pred_check
          %p208 = pneg %p109
        $region22: #{tpu_custom_call.1} parent=11 // pred_check_branch
          %210 = sbr.rel (%p208) target = $region24
        $region23: #{tpu_custom_call.1} parent=11 // pred_region
          %s212 = ssub.s32 256, 256
          %213 = vsyncadd [#allocation6], %s212
          %s214 = sshll.u32 [#allocation7], 4
          %s215 = int_to_ptr.vmem [resolvable:$true] %s214
          %220 = dma.hbm_to_vmem [thread:$0]  %s3, 256, %s215, [#allocation6], 128, 128, 8
        $region24: #{tpu_custom_call.1} parent=11 // pred_fallthru
          _
        // Predicated region
        $region25: #{tpu_custom_call.1} parent=11 // pred_check
          %p221 = pneg %p130
        $region26: #{tpu_custom_call.1} parent=11 // pred_check_branch
          %223 = sbr.rel (%p221) target = $region28
        $region27: #{tpu_custom_call.1} parent=11 // pred_region
          %s225 = ssub.s32 1024, 1024
          %226 = vsyncadd [#allocation9], %s225
          %s227 = sshll.u32 [#allocation8], 4
          %s228 = int_to_ptr.vmem [resolvable:$true] %s227
          %233 = dma.hbm_to_vmem [thread:$0]  %s4, 1024, %s228, [#allocation9], 64, 64, 4
        $region28: #{tpu_custom_call.1} parent=11 // pred_fallthru
          _
        // Predicated region
        $region29: #{tpu_custom_call.1} parent=11 // pred_check
          %p234 = pneg %p151
        $region30: #{tpu_custom_call.1} parent=11 // pred_check_branch
          %236 = sbr.rel (%p234) target = $region32
        $region31: #{tpu_custom_call.1} parent=11 // pred_region
          _
        $region32: #{tpu_custom_call.1} parent=11 // pred_fallthru
          _
      $region12: #{tpu_custom_call.1} parent=5 // pred_fallthru
        _
      %p237 = scmp.lt.s32.totalorder %s20, 2
      // Predicated region
      $region33: #{tpu_custom_call.1} parent=5 // pred_check
        %p238 = pneg %p237
      $region34: #{tpu_custom_call.1} parent=5 // pred_check_branch
        %240 = sbr.rel (%p238) target = $region36
      $region35: #{tpu_custom_call.1} parent=5 // pred_region
        // Predicated region
        $region37: #{tpu_custom_call.1} parent=35 // pred_check
          %p241 = pneg %p40
        $region38: #{tpu_custom_call.1} parent=35 // pred_check_branch
          %243 = sbr.rel (%p241) target = $region40
        $region39: #{tpu_custom_call.1} parent=35 // pred_region
          %s244 = sand.u32 %s30, 1
          %s245 = scalar_lea.sflag [#allocation3], %s244
          %s246 = sand.u32 %s30, 1
          %s247 = smul.addr %s246, 128
          %s248 = scalar_lea.vmem [#allocation2], %s247
          %s249 = smul.u32 16, %s20
          %s251 = ssub.s32 2048, 2048
          %252 = vsyncadd %s245, %s251
          %s253 = smul.addr %s249, 2
          %s254 = smul.addr %s253, 64
          %s255 = scalar_lea.hbm %s0, %s254
          %s256 = sshll.u32 %s248, 4
          %s257 = int_to_ptr.vmem [resolvable:$true] %s256
          %262 = dma.hbm_to_vmem [thread:$0]  %s255, 2048, %s257, %s245, 128, 128, 8
        $region40: #{tpu_custom_call.1} parent=35 // pred_fallthru
          _
      $region36: #{tpu_custom_call.1} parent=5 // pred_fallthru
        _
      %p263 = scmp.le.s32.totalorder 1, %s20
      %p264 = scmp.lt.s32.totalorder %s20, 3
      %p265 = pnand %p263, %p264
      %p266 = pneg %p265
      // Predicated region
      $region41: #{tpu_custom_call.1} parent=5 // pred_check
        _
      $region42: #{tpu_custom_call.1} parent=5 // pred_check_branch
        %268 = sbr.rel (%p265) target = $region44
      $region43: #{tpu_custom_call.1} parent=5 // pred_region
        %s269 = ssub.s32 %s20, 1
        %s270 = sand.u32 %s33, 1
        %s271 = scalar_lea.sflag [#allocation3], %s270
        %s272 = sand.u32 %s33, 1
        %s273 = smul.addr %s272, 128
        %s274 = scalar_lea.vmem [#allocation2], %s273
        // Predicated region
        $region45: #{tpu_custom_call.1} parent=43 // pred_check
          %p275 = pneg %p46
        $region46: #{tpu_custom_call.1} parent=43 // pred_check_branch
          %277 = sbr.rel (%p275) target = $region48
        $region47: #{tpu_custom_call.1} parent=43 // pred_region
          %278 = dma.done %s271, 2048
        $region48: #{tpu_custom_call.1} parent=43 // pred_fallthru
          _
        // Predicated region
        $region49: #{tpu_custom_call.1} parent=43 // pred_check
          %p279 = pneg %p67
        $region50: #{tpu_custom_call.1} parent=43 // pred_check_branch
          %281 = sbr.rel (%p279) target = $region52
        $region51: #{tpu_custom_call.1} parent=43 // pred_region
          %282 = dma.done [#allocation6], 2048
        $region52: #{tpu_custom_call.1} parent=43 // pred_fallthru
          _
        // Predicated region
        $region53: #{tpu_custom_call.1} parent=43 // pred_check
          %p283 = pneg %p109
        $region54: #{tpu_custom_call.1} parent=43 // pred_check_branch
          %285 = sbr.rel (%p283) target = $region56
        $region55: #{tpu_custom_call.1} parent=43 // pred_region
          %286 = dma.done [#allocation6], 256
        $region56: #{tpu_custom_call.1} parent=43 // pred_fallthru
          _
        // Predicated region
        $region57: #{tpu_custom_call.1} parent=43 // pred_check
          %p287 = pneg %p130
        $region58: #{tpu_custom_call.1} parent=43 // pred_check_branch
          %289 = sbr.rel (%p287) target = $region60
        $region59: #{tpu_custom_call.1} parent=43 // pred_region
          %290 = dma.done [#allocation9], 1024
        $region60: #{tpu_custom_call.1} parent=43 // pred_fallthru
          _
        %s291 = sand.u32 %s33, 1
        %s292 = scalar_lea.sflag [#allocation3], %s291
        %s293 = sand.u32 %s33, 1
        %s294 = smul.addr %s293, 128
        %s295 = scalar_lea.vmem [#allocation2], %s294
        %p296 = pneg %p46
        %p297 = pneg %p43
        %p298 = pneg %p67
        %p299 = pneg %p64
        %p300 = pneg %p88
        %p301 = pneg %p85
        %p302 = pneg %p109
        %p303 = pneg %p106
        %p304 = pneg %p130
        %p305 = pneg %p127
        %p306 = pneg %p151
        %p307 = pneg %p148
        %p308 = pneg %p177
        %p309 = pneg %p174
        %s310 = sand.u32 %s164, 1
        %s311 = scalar_lea.sflag [#allocation4], %s310
        %s312 = sand.u32 %s164, 1
        %s313 = smul.addr %s312, 8
        %s314 = scalar_lea.vmem [#allocation10], %s313
        %s315 = smul.u32 16, %s25
        %v317 = vld [vmem:[%s274] sm:$0xff]
        %v318 = vld [vmem:[%s274 + $0x8] sm:$0xff]
        %v319 = vld [vmem:[%s274 + $0x10] sm:$0xff]
        %v320 = vld [vmem:[%s274 + $0x18] sm:$0xff]
        %v321 = vld [vmem:[%s274 + $0x20] sm:$0xff]
        %v322 = vld [vmem:[%s274 + $0x28] sm:$0xff]
        %v323 = vld [vmem:[%s274 + $0x30] sm:$0xff]
        %v324 = vld [vmem:[%s274 + $0x38] sm:$0xff]
        %v325 = vld [vmem:[%s274 + $0x40] sm:$0xff]
        %v326 = vld [vmem:[%s274 + $0x48] sm:$0xff]
        %v327 = vld [vmem:[%s274 + $0x50] sm:$0xff]
        %v328 = vld [vmem:[%s274 + $0x58] sm:$0xff]
        %v329 = vld [vmem:[%s274 + $0x60] sm:$0xff]
        %v330 = vld [vmem:[%s274 + $0x68] sm:$0xff]
        %v331 = vld [vmem:[%s274 + $0x70] sm:$0xff]
        %v332 = vld [vmem:[%s274 + $0x78] sm:$0xff]
        %v333 = vld [vmem:[#allocation5] sm:$0xf]
        %v334 = vld [vmem:[#allocation5 + $0x4] sm:$0xf]
        %v335 = vld [vmem:[#allocation5 + $0x8] sm:$0xf]
        %v336 = vld [vmem:[#allocation5 + $0xc] sm:$0xf]
        %v337 = vld [vmem:[#allocation5 + $0x10] sm:$0xf]
        %v338 = vld [vmem:[#allocation5 + $0x14] sm:$0xf]
        %v339 = vld [vmem:[#allocation5 + $0x18] sm:$0xf]
        %v340 = vld [vmem:[#allocation5 + $0x1c] sm:$0xf]
        %v341 = vld [vmem:[#allocation5 + $0x20] sm:$0xf]
        %v342 = vld [vmem:[#allocation5 + $0x24] sm:$0xf]
        %v343 = vld [vmem:[#allocation5 + $0x28] sm:$0xf]
        %v344 = vld [vmem:[#allocation5 + $0x2c] sm:$0xf]
        %v345 = vld [vmem:[#allocation5 + $0x30] sm:$0xf]
        %v346 = vld [vmem:[#allocation5 + $0x34] sm:$0xf]
        %v347 = vld [vmem:[#allocation5 + $0x38] sm:$0xf]
        %v348 = vld [vmem:[#allocation5 + $0x3c] sm:$0xf]
        %v349 = vld [vmem:[#allocation5 + $0x40] sm:$0xf]
        %v350 = vld [vmem:[#allocation5 + $0x44] sm:$0xf]
        %v351 = vld [vmem:[#allocation5 + $0x48] sm:$0xf]
        %v352 = vld [vmem:[#allocation5 + $0x4c] sm:$0xf]
        %v353 = vld [vmem:[#allocation5 + $0x50] sm:$0xf]
        %v354 = vld [vmem:[#allocation5 + $0x54] sm:$0xf]
        %v355 = vld [vmem:[#allocation5 + $0x58] sm:$0xf]
        %v356 = vld [vmem:[#allocation5 + $0x5c] sm:$0xf]
        %v357 = vld [vmem:[#allocation5 + $0x60] sm:$0xf]
        %v358 = vld [vmem:[#allocation5 + $0x64] sm:$0xf]
        %v359 = vld [vmem:[#allocation5 + $0x68] sm:$0xf]
        %v360 = vld [vmem:[#allocation5 + $0x6c] sm:$0xf]
        %v361 = vld [vmem:[#allocation5 + $0x70] sm:$0xf]
        %v362 = vld [vmem:[#allocation5 + $0x74] sm:$0xf]
        %v363 = vld [vmem:[#allocation5 + $0x78] sm:$0xf]
        %v364 = vld [vmem:[#allocation5 + $0x7c] sm:$0xf]
        %v365 = vld [vmem:[%s2] sm:$0x1]
        %v367 = vlaneseq
        %v368 = vshrl.u32 %v367, 7
        %v369 = vsub.s32 0, %v368
        %v370 = vrot.slane %v365, %v369
        %v388 = vunpack.c.l.b16 %v317
        %v389 = vunpack.c.h.b16 %v317
        %v390 = vunpack.c.l.b16 %v318
        %v391 = vunpack.c.h.b16 %v318
        %v392 = vunpack.c.l.b16 %v319
        %v393 = vunpack.c.h.b16 %v319
        %v394 = vunpack.c.l.b16 %v320
        %v395 = vunpack.c.h.b16 %v320
        %v396 = vunpack.c.l.b16 %v321
        %v397 = vunpack.c.h.b16 %v321
        %v398 = vunpack.c.l.b16 %v322
        %v399 = vunpack.c.h.b16 %v322
        %v400 = vunpack.c.l.b16 %v323
        %v401 = vunpack.c.h.b16 %v323
        %v402 = vunpack.c.l.b16 %v324
        %v403 = vunpack.c.h.b16 %v324
        %v404 = vunpack.c.l.b16 %v325
        %v405 = vunpack.c.h.b16 %v325
        %v406 = vunpack.c.l.b16 %v326
        %v407 = vunpack.c.h.b16 %v326
        %v408 = vunpack.c.l.b16 %v327
        %v409 = vunpack.c.h.b16 %v327
        %v410 = vunpack.c.l.b16 %v328
        %v411 = vunpack.c.h.b16 %v328
        %v412 = vunpack.c.l.b16 %v329
        %v413 = vunpack.c.h.b16 %v329
        %v414 = vunpack.c.l.b16 %v330
        %v415 = vunpack.c.h.b16 %v330
        %v416 = vunpack.c.l.b16 %v331
        %v417 = vunpack.c.h.b16 %v331
        %v418 = vunpack.c.l.b16 %v332
        %v419 = vunpack.c.h.b16 %v332
        %v420 = vpack.c.b16 %v390, %v388
        %v421 = vpack.c.b16 %v391, %v389
        %v422 = vpack.c.b16 %v394, %v392
        %v423 = vpack.c.b16 %v395, %v393
        %v424 = vpack.c.b16 %v398, %v396
        %v425 = vpack.c.b16 %v399, %v397
        %v426 = vpack.c.b16 %v402, %v400
        %v427 = vpack.c.b16 %v403, %v401
        %v428 = vpack.c.b16 %v406, %v404
        %v429 = vpack.c.b16 %v407, %v405
        %v430 = vpack.c.b16 %v410, %v408
        %v431 = vpack.c.b16 %v411, %v409
        %v432 = vpack.c.b16 %v414, %v412
        %v433 = vpack.c.b16 %v415, %v413
        %v434 = vpack.c.b16 %v418, %v416
        %v435 = vpack.c.b16 %v419, %v417
        %v484 = vunpack.c.l.b16 %v333
        %v485 = vunpack.c.l.b16 %v334
        %v486 = vunpack.c.l.b16 %v335
        %v487 = vunpack.c.l.b16 %v336
        %v488 = vunpack.c.l.b16 %v337
        %v489 = vunpack.c.l.b16 %v338
        %v490 = vunpack.c.l.b16 %v339
        %v491 = vunpack.c.l.b16 %v340
        %v492 = vunpack.c.l.b16 %v341
        %v493 = vunpack.c.l.b16 %v342
        %v494 = vunpack.c.l.b16 %v343
        %v495 = vunpack.c.l.b16 %v344
        %v496 = vunpack.c.l.b16 %v345
        %v497 = vunpack.c.l.b16 %v346
        %v498 = vunpack.c.l.b16 %v347
        %v499 = vunpack.c.l.b16 %v348
        %v500 = vunpack.c.l.b16 %v349
        %v501 = vunpack.c.l.b16 %v350
        %v502 = vunpack.c.l.b16 %v351
        %v503 = vunpack.c.l.b16 %v352
        %v504 = vunpack.c.l.b16 %v353
        %v505 = vunpack.c.l.b16 %v354
        %v506 = vunpack.c.l.b16 %v355
        %v507 = vunpack.c.l.b16 %v356
        %v508 = vunpack.c.l.b16 %v357
        %v509 = vunpack.c.l.b16 %v358
        %v510 = vunpack.c.l.b16 %v359
        %v511 = vunpack.c.l.b16 %v360
        %v512 = vunpack.c.l.b16 %v361
        %v513 = vunpack.c.l.b16 %v362
        %v514 = vunpack.c.l.b16 %v363
        %v515 = vunpack.c.l.b16 %v364
        %v516 = vpack.c.b16 %v485, %v484
        %v517 = vpack.c.b16 %v487, %v486
        %v518 = vpack.c.b16 %v489, %v488
        %v519 = vpack.c.b16 %v491, %v490
        %v520 = vpack.c.b16 %v493, %v492
        %v521 = vpack.c.b16 %v495, %v494
        %v522 = vpack.c.b16 %v497, %v496
        %v523 = vpack.c.b16 %v499, %v498
        %v524 = vpack.c.b16 %v501, %v500
        %v525 = vpack.c.b16 %v503, %v502
        %v526 = vpack.c.b16 %v505, %v504
        %v527 = vpack.c.b16 %v507, %v506
        %v528 = vpack.c.b16 %v509, %v508
        %v529 = vpack.c.b16 %v511, %v510
        %v530 = vpack.c.b16 %v513, %v512
        %v531 = vpack.c.b16 %v515, %v514
        %548 = vmatprep.subr.bf16.mxu0 0
        %549 = vmatpush1.bf16.msra.mxu0 %v523
        %550 = vmatprep.subr.bf16.mxu0 0
        %551 = vmatpush1.bf16.msra.mxu0 %v522
        %552 = vmatprep.subr.bf16.mxu0 0
        %553 = vmatpush1.bf16.msra.mxu0 %v521
        %554 = vmatprep.subr.bf16.mxu0 0
        %555 = vmatpush1.bf16.msra.mxu0 %v520
        %556 = vmatprep.subr.bf16.mxu0 0
        %557 = vmatpush1.bf16.msra.mxu0 %v519
        %558 = vmatprep.subr.bf16.mxu0 0
        %559 = vmatpush1.bf16.msra.mxu0 %v518
        %560 = vmatprep.subr.bf16.mxu0 0
        %561 = vmatpush1.bf16.msra.mxu0 %v517
        %562 = vmatprep.subr.bf16.mxu0 0
        %563 = vmatpush1.bf16.msra.mxu0 %v516
        %564 = vmatprep.subr.bf16.mxu0 0
        %565 = vmatpush2.bf16.msra.mxu0 %v531
        %566 = vmatprep.subr.bf16.mxu0 0
        %567 = vmatpush2.bf16.msra.mxu0 %v530
        %568 = vmatprep.subr.bf16.mxu0 0
        %569 = vmatpush2.bf16.msra.mxu0 %v529
        %570 = vmatprep.subr.bf16.mxu0 0
        %571 = vmatpush2.bf16.msra.mxu0 %v528
        %572 = vmatprep.subr.bf16.mxu0 0
        %573 = vmatpush2.bf16.msra.mxu0 %v527
        %574 = vmatprep.subr.bf16.mxu0 0
        %575 = vmatpush2.bf16.msra.mxu0 %v526
        %576 = vmatprep.subr.bf16.mxu0 0
        %577 = vmatpush2.bf16.msra.mxu0 %v525
        %578 = vmatprep.subr.bf16.mxu0 0
        %579 = vmatpush2.bf16.msra.mxu0 %v524
        %580 = vmatprep.mubr.bf16.mxu0 %v421
        %581 = vmatmul.mubr.bf16.gmra.mxu0 %v420
        %v582 = vpop.f32.mrf.mxu0
        %v583 = vadd.f32 %v370, %v582
        %v584 = vpop.f32.mrf.mxu0
        %v585 = vpop.f32.mrf.mxu0
        %v586 = vadd.f32 %v370, %v585
        %v587 = vpop.f32.mrf.mxu0
        %588 = vmatprep.mubr.bf16.mxu0 %v423
        %589 = vmatmul.mubr.bf16.gmra.mxu0 %v422
        %v590 = vpop.f32.mrf.mxu0
        %v591 = vadd.f32 %v370, %v590
        %v592 = vpop.f32.mrf.mxu0
        %v593 = vpop.f32.mrf.mxu0
        %v594 = vadd.f32 %v370, %v593
        %v595 = vpop.f32.mrf.mxu0
        %596 = vmatprep.mubr.bf16.mxu0 %v425
        %597 = vmatmul.mubr.bf16.gmra.mxu0 %v424
        %v598 = vpop.f32.mrf.mxu0
        %v599 = vadd.f32 %v370, %v598
        %v600 = vpop.f32.mrf.mxu0
        %v601 = vpop.f32.mrf.mxu0
        %v602 = vadd.f32 %v370, %v601
        %v603 = vpop.f32.mrf.mxu0
        %604 = vmatprep.mubr.bf16.mxu0 %v427
        %605 = vmatmul.mubr.bf16.gmra.mxu0 %v426
        %v606 = vpop.f32.mrf.mxu0
        %v607 = vadd.f32 %v370, %v606
        %v608 = vpop.f32.mrf.mxu0
        %v609 = vpop.f32.mrf.mxu0
        %v610 = vadd.f32 %v370, %v609
        %v611 = vpop.f32.mrf.mxu0
        %612 = vmatprep.mubr.bf16.mxu0 %v429
        %613 = vmatmul.mubr.bf16.gmra.mxu0 %v428
        %v614 = vpop.f32.mrf.mxu0
        %v615 = vadd.f32 %v370, %v614
        %v616 = vpop.f32.mrf.mxu0
        %v617 = vpop.f32.mrf.mxu0
        %v618 = vadd.f32 %v370, %v617
        %v619 = vpop.f32.mrf.mxu0
        %620 = vmatprep.mubr.bf16.mxu0 %v431
        %621 = vmatmul.mubr.bf16.gmra.mxu0 %v430
        %v622 = vpop.f32.mrf.mxu0
        %v623 = vadd.f32 %v370, %v622
        %v624 = vpop.f32.mrf.mxu0
        %v625 = vpop.f32.mrf.mxu0
        %v626 = vadd.f32 %v370, %v625
        %v627 = vpop.f32.mrf.mxu0
        %628 = vmatprep.mubr.bf16.mxu0 %v433
        %629 = vmatmul.mubr.bf16.gmra.mxu0 %v432
        %v630 = vpop.f32.mrf.mxu0
        %v631 = vadd.f32 %v370, %v630
        %v632 = vpop.f32.mrf.mxu0
        %v633 = vpop.f32.mrf.mxu0
        %v634 = vadd.f32 %v370, %v633
        %v635 = vpop.f32.mrf.mxu0
        %636 = vmatprep.mubr.bf16.mxu0 %v435
        %637 = vmatmul.mubr.bf16.gmra.mxu0 %v434
        %v638 = vpop.f32.mrf.mxu0
        %v639 = vadd.f32 %v370, %v638
        %v640 = vpop.f32.mrf.mxu0
        %v641 = vpop.f32.mrf.mxu0
        %v642 = vadd.f32 %v370, %v641
        %v643 = vpop.f32.mrf.mxu0
        %644 = vdwg.mxu0
        %v645 = vmul.f32 %v583, 0.01
        %v646 = vmul.f32 %v586, 0.01
        %v647 = vmul.f32 %v591, 0.01
        %v648 = vmul.f32 %v594, 0.01
        %v649 = vmul.f32 %v599, 0.01
        %v650 = vmul.f32 %v602, 0.01
        %v651 = vmul.f32 %v607, 0.01
        %v652 = vmul.f32 %v610, 0.01
        %v653 = vmul.f32 %v615, 0.01
        %v654 = vmul.f32 %v618, 0.01
        %v655 = vmul.f32 %v623, 0.01
        %v656 = vmul.f32 %v626, 0.01
        %v657 = vmul.f32 %v631, 0.01
        %v658 = vmul.f32 %v634, 0.01
        %v659 = vmul.f32 %v639, 0.01
        %v660 = vmul.f32 %v642, 0.01
        %v661 = vmax.f32 %v583, %v645
        %v662 = vmax.f32 %v586, %v646
        %v663 = vmax.f32 %v591, %v647
        %v664 = vmax.f32 %v594, %v648
        %v665 = vmax.f32 %v599, %v649
        %v666 = vmax.f32 %v602, %v650
        %v667 = vmax.f32 %v607, %v651
        %v668 = vmax.f32 %v610, %v652
        %v669 = vmax.f32 %v615, %v653
        %v670 = vmax.f32 %v618, %v654
        %v671 = vmax.f32 %v623, %v655
        %v672 = vmax.f32 %v626, %v656
        %v673 = vmax.f32 %v631, %v657
        %v674 = vmax.f32 %v634, %v658
        %v675 = vmax.f32 %v639, %v659
        %v676 = vmax.f32 %v642, %v660
        %v677 = vld [vmem:[#allocation7] sm:$0xff]
        %v678 = vld [vmem:[#allocation7 + $0x8] sm:$0xff]
        %v679 = vadd.f32 %v661, %v677
        %v680 = vadd.f32 %v662, %v678
        %v681 = vadd.f32 %v663, %v677
        %v682 = vadd.f32 %v664, %v678
        %v683 = vadd.f32 %v665, %v677
        %v684 = vadd.f32 %v666, %v678
        %v685 = vadd.f32 %v667, %v677
        %v686 = vadd.f32 %v668, %v678
        %v687 = vadd.f32 %v669, %v677
        %v688 = vadd.f32 %v670, %v678
        %v689 = vadd.f32 %v671, %v677
        %v690 = vadd.f32 %v672, %v678
        %v691 = vadd.f32 %v673, %v677
        %v692 = vadd.f32 %v674, %v678
        %v693 = vadd.f32 %v675, %v677
        %v694 = vadd.f32 %v676, %v678
        %v695 = vmax.f32 %v679, %v680
        %v696 = vrot.slane %v695, 4
        %v697 = vmax.f32 %v695, %v696
        %v698 = vrot.slane %v697, 2
        %v699 = vmax.f32 %v697, %v698
        %v700 = vrot.slane %v699, 1
        %v701 = vmax.f32 %v699, %v700
        %v702 = vmax.f32 %v681, %v682
        %v703 = vrot.slane %v702, 4
        %v704 = vmax.f32 %v702, %v703
        %v705 = vrot.slane %v704, 2
        %v706 = vmax.f32 %v704, %v705
        %v707 = vrot.slane %v706, 1
        %v708 = vmax.f32 %v706, %v707
        %v709 = vmax.f32 %v683, %v684
        %v710 = vrot.slane %v709, 4
        %v711 = vmax.f32 %v709, %v710
        %v712 = vrot.slane %v711, 2
        %v713 = vmax.f32 %v711, %v712
        %v714 = vrot.slane %v713, 1
        %v715 = vmax.f32 %v713, %v714
        %v716 = vmax.f32 %v685, %v686
        %v717 = vrot.slane %v716, 4
        %v718 = vmax.f32 %v716, %v717
        %v719 = vrot.slane %v718, 2
        %v720 = vmax.f32 %v718, %v719
        %v721 = vrot.slane %v720, 1
        %v722 = vmax.f32 %v720, %v721
        %v723 = vmax.f32 %v687, %v688
        %v724 = vrot.slane %v723, 4
        %v725 = vmax.f32 %v723, %v724
        %v726 = vrot.slane %v725, 2
        %v727 = vmax.f32 %v725, %v726
        %v728 = vrot.slane %v727, 1
        %v729 = vmax.f32 %v727, %v728
        %v730 = vmax.f32 %v689, %v690
        %v731 = vrot.slane %v730, 4
        %v732 = vmax.f32 %v730, %v731
        %v733 = vrot.slane %v732, 2
        %v734 = vmax.f32 %v732, %v733
        %v735 = vrot.slane %v734, 1
        %v736 = vmax.f32 %v734, %v735
        %v737 = vmax.f32 %v691, %v692
        %v738 = vrot.slane %v737, 4
        %v739 = vmax.f32 %v737, %v738
        %v740 = vrot.slane %v739, 2
        %v741 = vmax.f32 %v739, %v740
        %v742 = vrot.slane %v741, 1
        %v743 = vmax.f32 %v741, %v742
        %v744 = vmax.f32 %v693, %v694
        %v745 = vrot.slane %v744, 4
        %v746 = vmax.f32 %v744, %v745
        %v747 = vrot.slane %v746, 2
        %v748 = vmax.f32 %v746, %v747
        %v749 = vrot.slane %v748, 1
        %v750 = vmax.f32 %v748, %v749
        %v751 = vpack.c.bf16 %v701, %v701
        %v752 = vpack.c.bf16 %v708, %v708
        %v753 = vpack.c.bf16 %v715, %v715
        %v754 = vpack.c.bf16 %v722, %v722
        %v755 = vpack.c.bf16 %v729, %v729
        %v756 = vpack.c.bf16 %v736, %v736
        %v757 = vpack.c.bf16 %v743, %v743
        %v758 = vpack.c.bf16 %v750, %v750
        %v759 = vld [vmem:[#allocation8] sm:$0xf]
        %v760 = vld [vmem:[#allocation8 + $0x4] sm:$0xf]
        %v761 = vld [vmem:[#allocation8 + $0x8] sm:$0xf]
        %v762 = vld [vmem:[#allocation8 + $0xc] sm:$0xf]
        %v763 = vld [vmem:[#allocation8 + $0x10] sm:$0xf]
        %v764 = vld [vmem:[#allocation8 + $0x14] sm:$0xf]
        %v765 = vld [vmem:[#allocation8 + $0x18] sm:$0xf]
        %v766 = vld [vmem:[#allocation8 + $0x1c] sm:$0xf]
        %v767 = vld [vmem:[#allocation8 + $0x20] sm:$0xf]
        %v768 = vld [vmem:[#allocation8 + $0x24] sm:$0xf]
        %v769 = vld [vmem:[#allocation8 + $0x28] sm:$0xf]
        %v770 = vld [vmem:[#allocation8 + $0x2c] sm:$0xf]
        %v771 = vld [vmem:[#allocation8 + $0x30] sm:$0xf]
        %v772 = vld [vmem:[#allocation8 + $0x34] sm:$0xf]
        %v773 = vld [vmem:[#allocation8 + $0x38] sm:$0xf]
        %v774 = vld [vmem:[#allocation8 + $0x3c] sm:$0xf]
        %v775 = vld [vmem:[%s5] sm:$0x1]
        %v777 = vlaneseq
        %v778 = vshrl.u32 %v777, 7
        %v779 = vsub.s32 0, %v778
        %v780 = vrot.slane %v775, %v779
        %v790 = vunpack.c.l.b16 %v751
        %v791 = vunpack.c.l.b16 %v752
        %v792 = vunpack.c.l.b16 %v753
        %v793 = vunpack.c.l.b16 %v754
        %v794 = vunpack.c.l.b16 %v755
        %v795 = vunpack.c.l.b16 %v756
        %v796 = vunpack.c.l.b16 %v757
        %v797 = vunpack.c.l.b16 %v758
        %vm798 = vcmask 1041409
        %v799 = vsel %vm798, %v791, %v790
        %vm800 = vcmask 1042434
        %v801 = vsel %vm800, %v792, %v799
        %vm802 = vcmask 1043459
        %v803 = vsel %vm802, %v793, %v801
        %vm804 = vcmask 1044484
        %v805 = vsel %vm804, %v794, %v803
        %vm806 = vcmask 1045509
        %v807 = vsel %vm806, %v795, %v805
        %vm808 = vcmask 1046534
        %v809 = vsel %vm808, %v796, %v807
        %vm810 = vcmask 1047559
        %v811 = vsel %vm810, %v797, %v809
        %v812 = vpack.c.b16 %v811, %v811
        %v830 = vunpack.c.l.b16 %v759
        %v831 = vunpack.c.l.b16 %v760
        %v832 = vunpack.c.l.b16 %v761
        %v833 = vunpack.c.l.b16 %v762
        %v834 = vunpack.c.l.b16 %v763
        %v835 = vunpack.c.l.b16 %v764
        %v836 = vunpack.c.l.b16 %v765
        %v837 = vunpack.c.l.b16 %v766
        %v838 = vunpack.c.l.b16 %v767
        %v839 = vunpack.c.l.b16 %v768
        %v840 = vunpack.c.l.b16 %v769
        %v841 = vunpack.c.l.b16 %v770
        %v842 = vunpack.c.l.b16 %v771
        %v843 = vunpack.c.l.b16 %v772
        %v844 = vunpack.c.l.b16 %v773
        %v845 = vunpack.c.l.b16 %v774
        %v846 = vpack.c.b16 %v831, %v830
        %v847 = vpack.c.b16 %v833, %v832
        %v848 = vpack.c.b16 %v835, %v834
        %v849 = vpack.c.b16 %v837, %v836
        %v850 = vpack.c.b16 %v839, %v838
        %v851 = vpack.c.b16 %v841, %v840
        %v852 = vpack.c.b16 %v843, %v842
        %v853 = vpack.c.b16 %v845, %v844
        %862 = vmatprep.subr.bf16.mxu0 0
        %863 = vmatpush1.bf16.msra.mxu0 %v853
        %864 = vmatprep.subr.bf16.mxu0 0
        %865 = vmatpush1.bf16.msra.mxu0 %v852
        %866 = vmatprep.subr.bf16.mxu0 0
        %867 = vmatpush1.bf16.msra.mxu0 %v851
        %868 = vmatprep.subr.bf16.mxu0 0
        %869 = vmatpush1.bf16.msra.mxu0 %v850
        %870 = vmatprep.subr.bf16.mxu0 0
        %871 = vmatpush1.bf16.msra.mxu0 %v849
        %872 = vmatprep.subr.bf16.mxu0 0
        %873 = vmatpush1.bf16.msra.mxu0 %v848
        %874 = vmatprep.subr.bf16.mxu0 0
        %875 = vmatpush1.bf16.msra.mxu0 %v847
        %876 = vmatprep.subr.bf16.mxu0 0
        %877 = vmatpush1.bf16.msra.mxu0 %v846
        %878 = vmatprep.subr.bf16.mxu0 0
        %879 = vmatpush2.bf16.msra.mxu0 0
        %880 = vmatprep.subr.bf16.mxu0 0
        %881 = vmatpush2.bf16.msra.mxu0 0
        %882 = vmatprep.subr.bf16.mxu0 0
        %883 = vmatpush2.bf16.msra.mxu0 0
        %884 = vmatprep.subr.bf16.mxu0 0
        %885 = vmatpush2.bf16.msra.mxu0 0
        %886 = vmatprep.subr.bf16.mxu0 0
        %887 = vmatpush2.bf16.msra.mxu0 0
        %888 = vmatprep.subr.bf16.mxu0 0
        %889 = vmatpush2.bf16.msra.mxu0 0
        %890 = vmatprep.subr.bf16.mxu0 0
        %891 = vmatpush2.bf16.msra.mxu0 0
        %892 = vmatprep.subr.bf16.mxu0 0
        %893 = vmatpush2.bf16.msra.mxu0 0
        %894 = vmatprep.mubr.bf16.mxu0 0
        %895 = vmatmul.mubr.bf16.gmra.mxu0 %v812
        %v896 = vpop.f32.mrf.mxu0
        %v897 = vadd.f32 %v780, %v896
        %v898 = vpop.f32.mrf.mxu0
        %v899 = vpop.f32.mrf.mxu0
        %v900 = vpop.f32.mrf.mxu0
        %901 = vdwg.mxu0
        %902 = vmax.xlane.f32.xlu0 %v897
        %v903 = vpop.xlane.xlu0 %902
        %v904 = vsub.f32 %v897, %v903
        %v905 = vmul.f32 %v904, 1.442695
        %v906 = vpow.pop %v905
        %907 = vadd.xlane.f32.xlu0 %v906
        %v908 = vpop.xlane.xlu0 %907
        %v909 = vrcp.pop %v908
        %v910 = vmul.f32 %v906, %v909
        %911 = vst [vmem:[%s314] sm:$0xff] %v910
        %s912 = sand.u32 %s164, 1
        %s913 = scalar_lea.sflag [#allocation4], %s912
        %s914 = sand.u32 %s164, 1
        %s915 = smul.addr %s914, 8
        %s916 = scalar_lea.vmem [#allocation10], %s915
        // Predicated region
        $region61: #{tpu_custom_call.1} parent=43 // pred_check
          %p917 = pneg %p174
        $region62: #{tpu_custom_call.1} parent=43 // pred_check_branch
          %919 = sbr.rel (%p917) target = $region64
        $region63: #{tpu_custom_call.1} parent=43 // pred_region
          %s921 = ssub.s32 128, 128
          %922 = vsyncadd %s913, %s921
          %s923 = smul.addr %s25, 128
          %s924 = scalar_lea.hbm %s6, %s923
          %s926 = sshll.u32 %s916, 4
          %s927 = int_to_ptr.vmem [resolvable:$true] %s926
          %929 = dma.vmem_to_hbm [thread:$0]  %s927, 128, %s924, %s913
        $region64: #{tpu_custom_call.1} parent=43 // pred_fallthru
          _
      $region44: #{tpu_custom_call.1} parent=5 // pred_fallthru
        _
      %p930 = scmp.le.s32.totalorder 2, %s20
      // Predicated region
      $region65: #{tpu_custom_call.1} parent=5 // pred_check
        %p931 = pneg %p930
      $region66: #{tpu_custom_call.1} parent=5 // pred_check_branch
        %933 = sbr.rel (%p931) target = $region68
      $region67: #{tpu_custom_call.1} parent=5 // pred_region
        %s934 = ssub.s32 %s20, 2
        // Predicated region
        $region69: #{tpu_custom_call.1} parent=67 // pred_check
          %p935 = pneg %p180
        $region70: #{tpu_custom_call.1} parent=67 // pred_check_branch
          %937 = sbr.rel (%p935) target = $region72
        $region71: #{tpu_custom_call.1} parent=67 // pred_region
          %s938 = sand.u32 %s165, 1
          %s939 = scalar_lea.sflag [#allocation4], %s938
          %s940 = sand.u32 %s165, 1
          %s941 = smul.addr %s940, 8
          %s942 = scalar_lea.vmem [#allocation10], %s941
          %943 = dma.done %s939, 128
        $region72: #{tpu_custom_call.1} parent=67 // pred_fallthru
          _
      $region68: #{tpu_custom_call.1} parent=5 // pred_fallthru
        _
    $region6: #{tpu_custom_call.1} parent=1 // loop_footer
      %s24 = sadd.s32 1, %s20
    $region7: #{tpu_custom_call.1} parent=1 // loop_footer_branch
      %19 = sbr.rel target = $region3
    $region8: #{tpu_custom_call.1} parent=1 // loop_exit
      _
    %944 = vsyncpa [#allocation3], 1
    %s945 = scalar_lea.sflag [#allocation3], 1
    %946 = vsyncpa %s945, 1
    %947 = vsyncpa [#allocation6], 1
    %948 = vsyncpa [#allocation9], 1
    %949 = vsyncpa [#allocation4], 1
    %s950 = scalar_lea.sflag [#allocation4], 1
    %951 = vsyncpa %s950, 1

// kernel: tpu_custom_call.1
$region0: #{tpu_custom_call.1}
  #allocation0 [shape = 'u32[]', space=smem, size = 0x4, offset = 0x4, fixed_abs, tag = 'smem constant byte address 0x4 - core index']
  #allocation1 [shape = 'u32[144,128]{1,0:T(1,128)}', space=vmem, size = 0x12000, scoped, tag = 'internal scratch']
  %s0 = inlined_call_operand.hbm [shape: bf16[256,256], index: 0, kind: input, shape index: {}]
  %s1 = inlined_call_operand.hbm [shape: bf16[256,128], index: 1, kind: input, shape index: {}]
  %s2 = inlined_call_operand.vmem [shape: f32[1,128], index: 2, kind: input, shape index: {}]
  %s3 = inlined_call_operand.hbm [shape: f32[16,128], index: 3, kind: input, shape index: {}]
  %s4 = inlined_call_operand.hbm [shape: bf16[128,128], index: 4, kind: input, shape index: {}]
  %s5 = inlined_call_operand.vmem [shape: f32[1,128], index: 5, kind: input, shape index: {}]
  %s6 = inlined_call_operand.hbm [shape: f32[16,128], index: 6, kind: output, shape index: {}]
  %s7 = sld [smem:[#allocation0]]
  $region73: #{tpu_custom_call.1} parent=0
    _
  %s9 = ssub.s32 1, %s7
  %s10 = scalar_select 0, %s9, %s7
  $region1: #{tpu_custom_call.1} parent=0
    #allocation2 [shape = 'u8[131072]{0}', space=vmem, size = 0x20000, scoped, tag = 'input window, operand 0']
    #allocation3 [shape = 's32[2]{0}', space=sflag, size = 0x8, scoped, tag = 'scoped memory for tpu_custom_call.1']
    #allocation4 [shape = 's32[2]{0}', space=sflag, size = 0x8, scoped, tag = 'scoped memory for tpu_custom_call.1']
    #allocation5 [shape = 'u8[65536]{0}', space=vmem, size = 0x10000, scoped, tag = 'input window, operand 1, single buffered']
    #allocation6 [shape = 's32[1]{0}', space=sflag, size = 0x4, scoped, tag = 'scoped memory for tpu_custom_call.1']
    #allocation7 [shape = 'u8[8192]{0}', space=vmem, size = 0x2000, scoped, tag = 'input window, operand 3, single buffered']
    #allocation8 [shape = 'u8[32768]{0}', space=vmem, size = 0x8000, scoped, tag = 'input window, operand 4, single buffered']
    #allocation9 [shape = 's32[1]{0}', space=sflag, size = 0x4, scoped, tag = 'scoped memory for tpu_custom_call.1']
    #allocation10 [shape = 'u8[8192]{0}', space=vmem, size = 0x2000, scoped, tag = 'output window, operand 0']
    %11 = vsyncpa [#allocation3], 0
    %s12 = scalar_lea.sflag [#allocation3], 1
    %13 = vsyncpa %s12, 0
    %14 = vsyncpa [#allocation6], 0
    %15 = vsyncpa [#allocation9], 0
    %16 = vsyncpa [#allocation4], 0
    %s17 = scalar_lea.sflag [#allocation4], 1
    %18 = vsyncpa %s17, 0
    loop: start=0, step=1, limit=4
    $region2: #{tpu_custom_call.1} parent=1 // loop_pre_header
      _
    $region3: #{tpu_custom_call.1} parent=1 // loop_header
      %s20 = sphi 0, %s24
      %p21 = scmp.ge.s32.totalorder %s20, 4
      %s30 = sphi 0, %s32
      %s33 = sphi 0, %s30
      %s34 = sphi 0, %s33
      %s50 = sphi 0, %s34
      %s54 = sphi 0, %s54
      %s56 = sphi 0, %s54
      %s57 = sphi 0, %s56
      %s71 = sphi 0, %s57
      %s75 = sphi 0, %s75
      %s77 = sphi 0, %s75
      %s78 = sphi 0, %s77
      %s92 = sphi 0, %s78
      %s96 = sphi 0, %s96
      %s98 = sphi 0, %s96
      %s99 = sphi 0, %s98
      %s113 = sphi 0, %s99
      %s117 = sphi 0, %s117
      %s119 = sphi 0, %s117
      %s120 = sphi 0, %s119
      %s134 = sphi 0, %s120
      %s138 = sphi 0, %s138
      %s140 = sphi 0, %s138
      %s141 = sphi 0, %s140
      %s155 = sphi 0, %s141
      %s161 = sphi 0, %s163
      %s164 = sphi 0, %s161
      %s165 = sphi 0, %s164
      %s181 = sphi 0, %s165
    $region4: #{tpu_custom_call.1} parent=1 // loop_header_branch
      %23 = sbr.rel (%p21) target = $region8
    $region5: #{tpu_custom_call.1} parent=1 // loop_body
      %s25 = ssub.s32 %s20, 1
      %s26 = ssub.s32 %s20, 2
      %s27 = sadd.s32 %s20, 1
      %s28 = ssub.s32 %s20, %s27
      %p29 = scmp.eq.s32.totalorder %s28, 0
      %s31 = sadd.s32 %s30, 1
      %s32 = scalar_select %p29, %s30, %s31
      %p35 = pneg %p29
      %p36 = scmp.eq.s32.totalorder %s20, 1
      %p37 = por %p35, %p36
      %p38 = scmp.ne.s32.totalorder %s30, %s33
      %p39 = scmp.eq.s32.totalorder %s20, 0
      %p40 = por %p38, %p39
      %p41 = scmp.ne.s32.totalorder %s30, %s33
      %p42 = scmp.eq.s32.totalorder %s25, 1
      %p43 = por %p41, %p42
      %p44 = scmp.ne.s32.totalorder %s33, %s34
      %p45 = scmp.eq.s32.totalorder %s25, 0
      %p46 = por %p44, %p45
      %p47 = scmp.ne.s32.totalorder %s33, %s34
      %p48 = scmp.eq.s32.totalorder %s26, 1
      %p49 = por %p47, %p48
      %p51 = scmp.ne.s32.totalorder %s34, %s50
      %p52 = scmp.eq.s32.totalorder %s26, 0
      %p53 = por %p51, %p52
      %s55 = sadd.s32 %s54, 1
      %p58 = scmp.eq.s32.totalorder %s20, 1
      %p59 = scmp.ne.s32.totalorder %s54, %s56
      %p60 = scmp.eq.s32.totalorder %s20, 0
      %p61 = por %p59, %p60
      %p62 = scmp.ne.s32.totalorder %s54, %s56
      %p63 = scmp.eq.s32.totalorder %s25, 1
      %p64 = por %p62, %p63
      %p65 = scmp.ne.s32.totalorder %s56, %s57
      %p66 = scmp.eq.s32.totalorder %s25, 0
      %p67 = por %p65, %p66
      %p68 = scmp.ne.s32.totalorder %s56, %s57
      %p69 = scmp.eq.s32.totalorder %s26, 1
      %p70 = por %p68, %p69
      %p72 = scmp.ne.s32.totalorder %s57, %s71
      %p73 = scmp.eq.s32.totalorder %s26, 0
      %p74 = por %p72, %p73
      %s76 = sadd.s32 %s75, 1
      %p79 = scmp.eq.s32.totalorder %s20, 1
      %p80 = scmp.ne.s32.totalorder %s75, %s77
      %p81 = scmp.eq.s32.totalorder %s20, 0
      %p82 = por %p80, %p81
      %p83 = scmp.ne.s32.totalorder %s75, %s77
      %p84 = scmp.eq.s32.totalorder %s25, 1
      %p85 = por %p83, %p84
      %p86 = scmp.ne.s32.totalorder %s77, %s78
      %p87 = scmp.eq.s32.totalorder %s25, 0
      %p88 = por %p86, %p87
      %p89 = scmp.ne.s32.totalorder %s77, %s78
      %p90 = scmp.eq.s32.totalorder %s26, 1
      %p91 = por %p89, %p90
      %p93 = scmp.ne.s32.totalorder %s78, %s92
      %p94 = scmp.eq.s32.totalorder %s26, 0
      %p95 = por %p93, %p94
      %s97 = sadd.s32 %s96, 1
      %p100 = scmp.eq.s32.totalorder %s20, 1
      %p101 = scmp.ne.s32.totalorder %s96, %s98
      %p102 = scmp.eq.s32.totalorder %s20, 0
      %p103 = por %p101, %p102
      %p104 = scmp.ne.s32.totalorder %s96, %s98
      %p105 = scmp.eq.s32.totalorder %s25, 1
      %p106 = por %p104, %p105
      %p107 = scmp.ne.s32.totalorder %s98, %s99
      %p108 = scmp.eq.s32.totalorder %s25, 0
      %p109 = por %p107, %p108
      %p110 = scmp.ne.s32.totalorder %s98, %s99
      %p111 = scmp.eq.s32.totalorder %s26, 1
      %p112 = por %p110, %p111
      %p114 = scmp.ne.s32.totalorder %s99, %s113
      %p115 = scmp.eq.s32.totalorder %s26, 0
      %p116 = por %p114, %p115
      %s118 = sadd.s32 %s117, 1
      %p121 = scmp.eq.s32.totalorder %s20, 1
      %p122 = scmp.ne.s32.totalorder %s117, %s119
      %p123 = scmp.eq.s32.totalorder %s20, 0
      %p124 = por %p122, %p123
      %p125 = scmp.ne.s32.totalorder %s117, %s119
      %p126 = scmp.eq.s32.totalorder %s25, 1
      %p127 = por %p125, %p126
      %p128 = scmp.ne.s32.totalorder %s119, %s120
      %p129 = scmp.eq.s32.totalorder %s25, 0
      %p130 = por %p128, %p129
      %p131 = scmp.ne.s32.totalorder %s119, %s120
      %p132 = scmp.eq.s32.totalorder %s26, 1
      %p133 = por %p131, %p132
      %p135 = scmp.ne.s32.totalorder %s120, %s134
      %p136 = scmp.eq.s32.totalorder %s26, 0
      %p137 = por %p135, %p136
      %s139 = sadd.s32 %s138, 1
      %p142 = scmp.eq.s32.totalorder %s20, 1
      %p143 = scmp.ne.s32.totalorder %s138, %s140
      %p144 = scmp.eq.s32.totalorder %s20, 0
      %p145 = por %p143, %p144
      %p146 = scmp.ne.s32.totalorder %s138, %s140
      %p147 = scmp.eq.s32.totalorder %s25, 1
      %p148 = por %p146, %p147
      %p149 = scmp.ne.s32.totalorder %s140, %s141
      %p150 = scmp.eq.s32.totalorder %s25, 0
      %p151 = por %p149, %p150
      %p152 = scmp.ne.s32.totalorder %s140, %s141
      %p153 = scmp.eq.s32.totalorder %s26, 1
      %p154 = por %p152, %p153
      %p156 = scmp.ne.s32.totalorder %s141, %s155
      %p157 = scmp.eq.s32.totalorder %s26, 0
      %p158 = por %p156, %p157
      %s159 = ssub.s32 %s20, %s27
      %p160 = scmp.eq.s32.totalorder %s159, 0
      %s162 = sadd.s32 %s161, 1
      %s163 = scalar_select %p160, %s161, %s162
      %p166 = pneg %p160
      %p167 = scmp.eq.s32.totalorder %s20, 1
      %p168 = por %p166, %p167
      %p169 = scmp.ne.s32.totalorder %s161, %s164
      %p170 = scmp.eq.s32.totalorder %s20, 0
      %p171 = por %p169, %p170
      %p172 = scmp.ne.s32.totalorder %s161, %s164
      %p173 = scmp.eq.s32.totalorder %s25, 1
      %p174 = por %p172, %p173
      %p175 = scmp.ne.s32.totalorder %s164, %s165
      %p176 = scmp.eq.s32.totalorder %s25, 0
      %p177 = por %p175, %p176
      %p178 = scmp.ne.s32.totalorder %s164, %s165
      %p179 = scmp.eq.s32.totalorder %s26, 1
      %p180 = por %p178, %p179
      %p182 = scmp.ne.s32.totalorder %s165, %s181
      %p183 = scmp.eq.s32.totalorder %s26, 0
      %p184 = por %p182, %p183
      %p185 = scmp.le.s32.totalorder 1, %s20
      %p186 = scmp.lt.s32.totalorder %s20, 3
      %p187 = pnand %p185, %p186
      %p188 = pneg %p187
      // Predicated region
      $region9: #{tpu_custom_call.1} parent=5 // pred_check
        _
      $region10: #{tpu_custom_call.1} parent=5 // pred_check_branch
        %190 = sbr.rel (%p187) target = $region12
      $region11: #{tpu_custom_call.1} parent=5 // pred_region
        %s191 = ssub.s32 %s20, 1
        // Predicated region
        $region13: #{tpu_custom_call.1} parent=11 // pred_check
          %p192 = pneg %p67
        $region14: #{tpu_custom_call.1} parent=11 // pred_check_branch
          %194 = sbr.rel (%p192) target = $region16
        $region15: #{tpu_custom_call.1} parent=11 // pred_region
          %s196 = ssub.s32 2048, 2048
          %197 = vsyncadd [#allocation6], %s196
          %s198 = sshll.u32 [#allocation5], 4
          %s199 = int_to_ptr.vmem [resolvable:$true] %s198
          %204 = dma.hbm_to_vmem [thread:$0]  %s1, 2048, %s199, [#allocation6], 64, 64, 4
        $region16: #{tpu_custom_call.1} parent=11 // pred_fallthru
          _
        // Predicated region
        $region17: #{tpu_custom_call.1} parent=11 // pred_check
          %p205 = pneg %p88
        $region18: #{tpu_custom_call.1} parent=11 // pred_check_branch
          %207 = sbr.rel (%p205) target = $region20
        $region19: #{tpu_custom_call.1} parent=11 // pred_region
          _
        $region20: #{tpu_custom_call.1} parent=11 // pred_fallthru
          _
        // Predicated region
        $region21: #{tpu_custom_call.1} parent=11 // pred_check
          %p208 = pneg %p109
        $region22: #{tpu_custom_call.1} parent=11 // pred_check_branch
          %210 = sbr.rel (%p208) target = $region24
        $region23: #{tpu_custom_call.1} parent=11 // pred_region
          %s212 = ssub.s32 256, 256
          %213 = vsyncadd [#allocation6], %s212
          %s214 = sshll.u32 [#allocation7], 4
          %s215 = int_to_ptr.vmem [resolvable:$true] %s214
          %220 = dma.hbm_to_vmem [thread:$0]  %s3, 256, %s215, [#allocation6], 128, 128, 8
        $region24: #{tpu_custom_call.1} parent=11 // pred_fallthru
          _
        // Predicated region
        $region25: #{tpu_custom_call.1} parent=11 // pred_check
          %p221 = pneg %p130
        $region26: #{tpu_custom_call.1} parent=11 // pred_check_branch
          %223 = sbr.rel (%p221) target = $region28
        $region27: #{tpu_custom_call.1} parent=11 // pred_region
          %s225 = ssub.s32 1024, 1024
          %226 = vsyncadd [#allocation9], %s225
          %s227 = sshll.u32 [#allocation8], 4
          %s228 = int_to_ptr.vmem [resolvable:$true] %s227
          %233 = dma.hbm_to_vmem [thread:$0]  %s4, 1024, %s228, [#allocation9], 64, 64, 4
        $region28: #{tpu_custom_call.1} parent=11 // pred_fallthru
          _
        // Predicated region
        $region29: #{tpu_custom_call.1} parent=11 // pred_check
          %p234 = pneg %p151
        $region30: #{tpu_custom_call.1} parent=11 // pred_check_branch
          %236 = sbr.rel (%p234) target = $region32
        $region31: #{tpu_custom_call.1} parent=11 // pred_region
          _
        $region32: #{tpu_custom_call.1} parent=11 // pred_fallthru
          _
      $region12: #{tpu_custom_call.1} parent=5 // pred_fallthru
        _
      %p237 = scmp.lt.s32.totalorder %s20, 2
      // Predicated region
      $region33: #{tpu_custom_call.1} parent=5 // pred_check
        %p238 = pneg %p237
      $region34: #{tpu_custom_call.1} parent=5 // pred_check_branch
        %240 = sbr.rel (%p238) target = $region36
      $region35: #{tpu_custom_call.1} parent=5 // pred_region
        // Predicated region
        $region37: #{tpu_custom_call.1} parent=35 // pred_check
          %p241 = pneg %p40
        $region38: #{tpu_custom_call.1} parent=35 // pred_check_branch
          %243 = sbr.rel (%p241) target = $region40
        $region39: #{tpu_custom_call.1} parent=35 // pred_region
          %s244 = sand.u32 %s30, 1
          %s245 = scalar_lea.sflag [#allocation3], %s244
          %s246 = sand.u32 %s30, 1
          %s247 = smul.addr %s246, 128
          %s248 = scalar_lea.vmem [#allocation2], %s247
          %s249 = smul.u32 16, %s20
          %s251 = ssub.s32 2048, 2048
          %252 = vsyncadd %s245, %s251
          %s253 = smul.addr %s249, 2
          %s254 = smul.addr %s253, 64
          %s255 = scalar_lea.hbm %s0, %s254
          %s256 = sshll.u32 %s248, 4
          %s257 = int_to_ptr.vmem [resolvable:$true] %s256
          %262 = dma.hbm_to_vmem [thread:$0]  %s255, 2048, %s257, %s245, 128, 128, 8
        $region40: #{tpu_custom_call.1} parent=35 // pred_fallthru
          _
      $region36: #{tpu_custom_call.1} parent=5 // pred_fallthru
        _
      %p263 = scmp.le.s32.totalorder 1, %s20
      %p264 = scmp.lt.s32.totalorder %s20, 3
      %p265 = pnand %p263, %p264
      %p266 = pneg %p265
      // Predicated region
      $region41: #{tpu_custom_call.1} parent=5 // pred_check
        _
      $region42: #{tpu_custom_call.1} parent=5 // pred_check_branch
        %268 = sbr.rel (%p265) target = $region44
      $region43: #{tpu_custom_call.1} parent=5 // pred_region
        %s269 = ssub.s32 %s20, 1
        %s270 = sand.u32 %s33, 1
        %s271 = scalar_lea.sflag [#allocation3], %s270
        %s272 = sand.u32 %s33, 1
        %s273 = smul.addr %s272, 128
        %s274 = scalar_lea.vmem [#allocation2], %s273
        // Predicated region
        $region45: #{tpu_custom_call.1} parent=43 // pred_check
          %p275 = pneg %p46
        $region46: #{tpu_custom_call.1} parent=43 // pred_check_branch
          %277 = sbr.rel (%p275) target = $region48
        $region47: #{tpu_custom_call.1} parent=43 // pred_region
          %278 = dma.done %s271, 2048
        $region48: #{tpu_custom_call.1} parent=43 // pred_fallthru
          _
        // Predicated region
        $region49: #{tpu_custom_call.1} parent=43 // pred_check
          %p279 = pneg %p67
        $region50: #{tpu_custom_call.1} parent=43 // pred_check_branch
          %281 = sbr.rel (%p279) target = $region52
        $region51: #{tpu_custom_call.1} parent=43 // pred_region
          %282 = dma.done [#allocation6], 2048
        $region52: #{tpu_custom_call.1} parent=43 // pred_fallthru
          _
        // Predicated region
        $region53: #{tpu_custom_call.1} parent=43 // pred_check
          %p283 = pneg %p109
        $region54: #{tpu_custom_call.1} parent=43 // pred_check_branch
          %285 = sbr.rel (%p283) target = $region56
        $region55: #{tpu_custom_call.1} parent=43 // pred_region
          %286 = dma.done [#allocation6], 256
        $region56: #{tpu_custom_call.1} parent=43 // pred_fallthru
          _
        // Predicated region
        $region57: #{tpu_custom_call.1} parent=43 // pred_check
          %p287 = pneg %p130
        $region58: #{tpu_custom_call.1} parent=43 // pred_check_branch
          %289 = sbr.rel (%p287) target = $region60
        $region59: #{tpu_custom_call.1} parent=43 // pred_region
          %290 = dma.done [#allocation9], 1024
        $region60: #{tpu_custom_call.1} parent=43 // pred_fallthru
          _
        %s291 = sand.u32 %s33, 1
        %s292 = scalar_lea.sflag [#allocation3], %s291
        %s293 = sand.u32 %s33, 1
        %s294 = smul.addr %s293, 128
        %s295 = scalar_lea.vmem [#allocation2], %s294
        %p296 = pneg %p46
        %p297 = pneg %p43
        %p298 = pneg %p67
        %p299 = pneg %p64
        %p300 = pneg %p88
        %p301 = pneg %p85
        %p302 = pneg %p109
        %p303 = pneg %p106
        %p304 = pneg %p130
        %p305 = pneg %p127
        %p306 = pneg %p151
        %p307 = pneg %p148
        %p308 = pneg %p177
        %p309 = pneg %p174
        %s310 = sand.u32 %s164, 1
        %s311 = scalar_lea.sflag [#allocation4], %s310
        %s312 = sand.u32 %s164, 1
        %s313 = smul.addr %s312, 8
        %s314 = scalar_lea.vmem [#allocation10], %s313
        %s315 = smul.u32 16, %s25
        %v317 = vld [vmem:[%s274] sm:$0xff]
        %v318 = vld [vmem:[%s274 + $0x8] sm:$0xff]
        %v319 = vld [vmem:[%s274 + $0x10] sm:$0xff]
        %v320 = vld [vmem:[%s274 + $0x18] sm:$0xff]
        %v321 = vld [vmem:[%s274 + $0x20] sm:$0xff]
        %v322 = vld [vmem:[%s274 + $0x28] sm:$0xff]
        %v323 = vld [vmem:[%s274 + $0x30] sm:$0xff]
        %v324 = vld [vmem:[%s274 + $0x38] sm:$0xff]
        %v325 = vld [vmem:[%s274 + $0x40] sm:$0xff]
        %v326 = vld [vmem:[%s274 + $0x48] sm:$0xff]
        %v327 = vld [vmem:[%s274 + $0x50] sm:$0xff]
        %v328 = vld [vmem:[%s274 + $0x58] sm:$0xff]
        %v329 = vld [vmem:[%s274 + $0x60] sm:$0xff]
        %v330 = vld [vmem:[%s274 + $0x68] sm:$0xff]
        %v331 = vld [vmem:[%s274 + $0x70] sm:$0xff]
        %v332 = vld [vmem:[%s274 + $0x78] sm:$0xff]
        %v333 = vld [vmem:[#allocation5] sm:$0xf]
        %v334 = vld [vmem:[#allocation5 + $0x4] sm:$0xf]
        %v335 = vld [vmem:[#allocation5 + $0x8] sm:$0xf]
        %v336 = vld [vmem:[#allocation5 + $0xc] sm:$0xf]
        %v337 = vld [vmem:[#allocation5 + $0x10] sm:$0xf]
        %v338 = vld [vmem:[#allocation5 + $0x14] sm:$0xf]
        %v339 = vld [vmem:[#allocation5 + $0x18] sm:$0xf]
        %v340 = vld [vmem:[#allocation5 + $0x1c] sm:$0xf]
        %v341 = vld [vmem:[#allocation5 + $0x20] sm:$0xf]
        %v342 = vld [vmem:[#allocation5 + $0x24] sm:$0xf]
        %v343 = vld [vmem:[#allocation5 + $0x28] sm:$0xf]
        %v344 = vld [vmem:[#allocation5 + $0x2c] sm:$0xf]
        %v345 = vld [vmem:[#allocation5 + $0x30] sm:$0xf]
        %v346 = vld [vmem:[#allocation5 + $0x34] sm:$0xf]
        %v347 = vld [vmem:[#allocation5 + $0x38] sm:$0xf]
        %v348 = vld [vmem:[#allocation5 + $0x3c] sm:$0xf]
        %v349 = vld [vmem:[#allocation5 + $0x40] sm:$0xf]
        %v350 = vld [vmem:[#allocation5 + $0x44] sm:$0xf]
        %v351 = vld [vmem:[#allocation5 + $0x48] sm:$0xf]
        %v352 = vld [vmem:[#allocation5 + $0x4c] sm:$0xf]
        %v353 = vld [vmem:[#allocation5 + $0x50] sm:$0xf]
        %v354 = vld [vmem:[#allocation5 + $0x54] sm:$0xf]
        %v355 = vld [vmem:[#allocation5 + $0x58] sm:$0xf]
        %v356 = vld [vmem:[#allocation5 + $0x5c] sm:$0xf]
        %v357 = vld [vmem:[#allocation5 + $0x60] sm:$0xf]
        %v358 = vld [vmem:[#allocation5 + $0x64] sm:$0xf]
        %v359 = vld [vmem:[#allocation5 + $0x68] sm:$0xf]
        %v360 = vld [vmem:[#allocation5 + $0x6c] sm:$0xf]
        %v361 = vld [vmem:[#allocation5 + $0x70] sm:$0xf]
        %v362 = vld [vmem:[#allocation5 + $0x74] sm:$0xf]
        %v363 = vld [vmem:[#allocation5 + $0x78] sm:$0xf]
        %v364 = vld [vmem:[#allocation5 + $0x7c] sm:$0xf]
        %v365 = vld [vmem:[%s2] sm:$0x1]
        %v367 = vlaneseq
        %v368 = vshrl.u32 %v367, 7
        %v369 = vsub.s32 0, %v368
        %v370 = vrot.slane %v365, %v369
        %v388 = vunpack.c.l.b16 %v317
        %v389 = vunpack.c.h.b16 %v317
        %v390 = vunpack.c.l.b16 %v318
        %v391 = vunpack.c.h.b16 %v318
        %v392 = vunpack.c.l.b16 %v319
        %v393 = vunpack.c.h.b16 %v319
        %v394 = vunpack.c.l.b16 %v320
        %v395 = vunpack.c.h.b16 %v320
        %v396 = vunpack.c.l.b16 %v321
        %v397 = vunpack.c.h.b16 %v321
        %v398 = vunpack.c.l.b16 %v322
        %v399 = vunpack.c.h.b16 %v322
        %v400 = vunpack.c.l.b16 %v323
        %v401 = vunpack.c.h.b16 %v323
        %v402 = vunpack.c.l.b16 %v324
        %v403 = vunpack.c.h.b16 %v324
        %v404 = vunpack.c.l.b16 %v325
        %v405 = vunpack.c.h.b16 %v325
        %v406 = vunpack.c.l.b16 %v326
        %v407 = vunpack.c.h.b16 %v326
        %v408 = vunpack.c.l.b16 %v327
        %v409 = vunpack.c.h.b16 %v327
        %v410 = vunpack.c.l.b16 %v328
        %v411 = vunpack.c.h.b16 %v328
        %v412 = vunpack.c.l.b16 %v329
        %v413 = vunpack.c.h.b16 %v329
        %v414 = vunpack.c.l.b16 %v330
        %v415 = vunpack.c.h.b16 %v330
        %v416 = vunpack.c.l.b16 %v331
        %v417 = vunpack.c.h.b16 %v331
        %v418 = vunpack.c.l.b16 %v332
        %v419 = vunpack.c.h.b16 %v332
        %v420 = vpack.c.b16 %v390, %v388
        %v421 = vpack.c.b16 %v391, %v389
        %v422 = vpack.c.b16 %v394, %v392
        %v423 = vpack.c.b16 %v395, %v393
        %v424 = vpack.c.b16 %v398, %v396
        %v425 = vpack.c.b16 %v399, %v397
        %v426 = vpack.c.b16 %v402, %v400
        %v427 = vpack.c.b16 %v403, %v401
        %v428 = vpack.c.b16 %v406, %v404
        %v429 = vpack.c.b16 %v407, %v405
        %v430 = vpack.c.b16 %v410, %v408
        %v431 = vpack.c.b16 %v411, %v409
        %v432 = vpack.c.b16 %v414, %v412
        %v433 = vpack.c.b16 %v415, %v413
        %v434 = vpack.c.b16 %v418, %v416
        %v435 = vpack.c.b16 %v419, %v417
        %v484 = vunpack.c.l.b16 %v333
        %v485 = vunpack.c.l.b16 %v334
        %v486 = vunpack.c.l.b16 %v335
        %v487 = vunpack.c.l.b16 %v336
        %v488 = vunpack.c.l.b16 %v337
        %v489 = vunpack.c.l.b16 %v338
        %v490 = vunpack.c.l.b16 %v339
        %v491 = vunpack.c.l.b16 %v340
        %v492 = vunpack.c.l.b16 %v341
        %v493 = vunpack.c.l.b16 %v342
        %v494 = vunpack.c.l.b16 %v343
        %v495 = vunpack.c.l.b16 %v344
        %v496 = vunpack.c.l.b16 %v345
        %v497 = vunpack.c.l.b16 %v346
        %v498 = vunpack.c.l.b16 %v347
        %v499 = vunpack.c.l.b16 %v348
        %v500 = vunpack.c.l.b16 %v349
        %v501 = vunpack.c.l.b16 %v350
        %v502 = vunpack.c.l.b16 %v351
        %v503 = vunpack.c.l.b16 %v352
        %v504 = vunpack.c.l.b16 %v353
        %v505 = vunpack.c.l.b16 %v354
        %v506 = vunpack.c.l.b16 %v355
        %v507 = vunpack.c.l.b16 %v356
        %v508 = vunpack.c.l.b16 %v357
        %v509 = vunpack.c.l.b16 %v358
        %v510 = vunpack.c.l.b16 %v359
        %v511 = vunpack.c.l.b16 %v360
        %v512 = vunpack.c.l.b16 %v361
        %v513 = vunpack.c.l.b16 %v362
        %v514 = vunpack.c.l.b16 %v363
        %v515 = vunpack.c.l.b16 %v364
        %v516 = vpack.c.b16 %v485, %v484
        %v517 = vpack.c.b16 %v487, %v486
        %v518 = vpack.c.b16 %v489, %v488
        %v519 = vpack.c.b16 %v491, %v490
        %v520 = vpack.c.b16 %v493, %v492
        %v521 = vpack.c.b16 %v495, %v494
        %v522 = vpack.c.b16 %v497, %v496
        %v523 = vpack.c.b16 %v499, %v498
        %v524 = vpack.c.b16 %v501, %v500
        %v525 = vpack.c.b16 %v503, %v502
        %v526 = vpack.c.b16 %v505, %v504
        %v527 = vpack.c.b16 %v507, %v506
        %v528 = vpack.c.b16 %v509, %v508
        %v529 = vpack.c.b16 %v511, %v510
        %v530 = vpack.c.b16 %v513, %v512
        %v531 = vpack.c.b16 %v515, %v514
        %548 = vmatprep.subr.bf16.mxu0 0
        %549 = vmatpush1.bf16.msra.mxu0 %v523
        %550 = vmatprep.subr.bf16.mxu0 0
        %551 = vmatpush1.bf16.msra.mxu0 %v522
        %552 = vmatprep.subr.bf16.mxu0 0
        %553 = vmatpush1.bf16.msra.mxu0 %v521
        %554 = vmatprep.subr.bf16.mxu0 0
        %555 = vmatpush1.bf16.msra.mxu0 %v520
        %556 = vmatprep.subr.bf16.mxu0 0
        %557 = vmatpush1.bf16.msra.mxu0 %v519
        %558 = vmatprep.subr.bf16.mxu0 0
        %559 = vmatpush1.bf16.msra.mxu0 %v518
        %560 = vmatprep.subr.bf16.mxu0 0
        %561 = vmatpush1.bf16.msra.mxu0 %v517
        %562 = vmatprep.subr.bf16.mxu0 0
        %563 = vmatpush1.bf16.msra.mxu0 %v516
        %564 = vmatprep.subr.bf16.mxu0 0
        %565 = vmatpush2.bf16.msra.mxu0 %v531
        %566 = vmatprep.subr.bf16.mxu0 0
        %567 = vmatpush2.bf16.msra.mxu0 %v530
        %568 = vmatprep.subr.bf16.mxu0 0
        %569 = vmatpush2.bf16.msra.mxu0 %v529
        %570 = vmatprep.subr.bf16.mxu0 0
        %571 = vmatpush2.bf16.msra.mxu0 %v528
        %572 = vmatprep.subr.bf16.mxu0 0
        %573 = vmatpush2.bf16.msra.mxu0 %v527
        %574 = vmatprep.subr.bf16.mxu0 0
        %575 = vmatpush2.bf16.msra.mxu0 %v526
        %576 = vmatprep.subr.bf16.mxu0 0
        %577 = vmatpush2.bf16.msra.mxu0 %v525
        %578 = vmatprep.subr.bf16.mxu0 0
        %579 = vmatpush2.bf16.msra.mxu0 %v524
        %580 = vmatprep.mubr.bf16.mxu0 %v421
        %581 = vmatmul.mubr.bf16.gmra.mxu0 %v420
        %v582 = vpop.f32.mrf.mxu0
        %v583 = vadd.f32 %v370, %v582
        %v584 = vpop.f32.mrf.mxu0
        %v585 = vpop.f32.mrf.mxu0
        %v586 = vadd.f32 %v370, %v585
        %v587 = vpop.f32.mrf.mxu0
        %588 = vmatprep.mubr.bf16.mxu0 %v423
        %589 = vmatmul.mubr.bf16.gmra.mxu0 %v422
        %v590 = vpop.f32.mrf.mxu0
        %v591 = vadd.f32 %v370, %v590
        %v592 = vpop.f32.mrf.mxu0
        %v593 = vpop.f32.mrf.mxu0
        %v594 = vadd.f32 %v370, %v593
        %v595 = vpop.f32.mrf.mxu0
        %596 = vmatprep.mubr.bf16.mxu0 %v425
        %597 = vmatmul.mubr.bf16.gmra.mxu0 %v424
        %v598 = vpop.f32.mrf.mxu0
        %v599 = vadd.f32 %v370, %v598
        %v600 = vpop.f32.mrf.mxu0
        %v601 = vpop.f32.mrf.mxu0
        %v602 = vadd.f32 %v370, %v601
        %v603 = vpop.f32.mrf.mxu0
        %604 = vmatprep.mubr.bf16.mxu0 %v427
        %605 = vmatmul.mubr.bf16.gmra.mxu0 %v426
        %v606 = vpop.f32.mrf.mxu0
        %v607 = vadd.f32 %v370, %v606
        %v608 = vpop.f32.mrf.mxu0
        %v609 = vpop.f32.mrf.mxu0
        %v610 = vadd.f32 %v370, %v609
        %v611 = vpop.f32.mrf.mxu0
        %612 = vmatprep.mubr.bf16.mxu0 %v429
        %613 = vmatmul.mubr.bf16.gmra.mxu0 %v428
        %v614 = vpop.f32.mrf.mxu0
        %v615 = vadd.f32 %v370, %v614
        %v616 = vpop.f32.mrf.mxu0
        %v617 = vpop.f32.mrf.mxu0
        %v618 = vadd.f32 %v370, %v617
        %v619 = vpop.f32.mrf.mxu0
        %620 = vmatprep.mubr.bf16.mxu0 %v431
        %621 = vmatmul.mubr.bf16.gmra.mxu0 %v430
        %v622 = vpop.f32.mrf.mxu0
        %v623 = vadd.f32 %v370, %v622
        %v624 = vpop.f32.mrf.mxu0
        %v625 = vpop.f32.mrf.mxu0
        %v626 = vadd.f32 %v370, %v625
        %v627 = vpop.f32.mrf.mxu0
        %628 = vmatprep.mubr.bf16.mxu0 %v433
        %629 = vmatmul.mubr.bf16.gmra.mxu0 %v432
        %v630 = vpop.f32.mrf.mxu0
        %v631 = vadd.f32 %v370, %v630
        %v632 = vpop.f32.mrf.mxu0
        %v633 = vpop.f32.mrf.mxu0
        %v634 = vadd.f32 %v370, %v633
        %v635 = vpop.f32.mrf.mxu0
        %636 = vmatprep.mubr.bf16.mxu0 %v435
        %637 = vmatmul.mubr.bf16.gmra.mxu0 %v434
        %v638 = vpop.f32.mrf.mxu0
        %v639 = vadd.f32 %v370, %v638
        %v640 = vpop.f32.mrf.mxu0
        %v641 = vpop.f32.mrf.mxu0
        %v642 = vadd.f32 %v370, %v641
        %v643 = vpop.f32.mrf.mxu0
        %644 = vdwg.mxu0
        %v645 = vmul.f32 %v583, 0.01
        %v646 = vmul.f32 %v586, 0.01
        %v647 = vmul.f32 %v591, 0.01
        %v648 = vmul.f32 %v594, 0.01
        %v649 = vmul.f32 %v599, 0.01
        %v650 = vmul.f32 %v602, 0.01
        %v651 = vmul.f32 %v607, 0.01
        %v652 = vmul.f32 %v610, 0.01
        %v653 = vmul.f32 %v615, 0.01
        %v654 = vmul.f32 %v618, 0.01
        %v655 = vmul.f32 %v623, 0.01
        %v656 = vmul.f32 %v626, 0.01
        %v657 = vmul.f32 %v631, 0.01
        %v658 = vmul.f32 %v634, 0.01
        %v659 = vmul.f32 %v639, 0.01
        %v660 = vmul.f32 %v642, 0.01
        %v661 = vmax.f32 %v583, %v645
        %v662 = vmax.f32 %v586, %v646
        %v663 = vmax.f32 %v591, %v647
        %v664 = vmax.f32 %v594, %v648
        %v665 = vmax.f32 %v599, %v649
        %v666 = vmax.f32 %v602, %v650
        %v667 = vmax.f32 %v607, %v651
        %v668 = vmax.f32 %v610, %v652
        %v669 = vmax.f32 %v615, %v653
        %v670 = vmax.f32 %v618, %v654
        %v671 = vmax.f32 %v623, %v655
        %v672 = vmax.f32 %v626, %v656
        %v673 = vmax.f32 %v631, %v657
        %v674 = vmax.f32 %v634, %v658
        %v675 = vmax.f32 %v639, %v659
        %v676 = vmax.f32 %v642, %v660
        %v677 = vld [vmem:[#allocation7] sm:$0xff]
        %v678 = vld [vmem:[#allocation7 + $0x8] sm:$0xff]
        %v679 = vadd.f32 %v661, %v677
        %v680 = vadd.f32 %v662, %v678
        %v681 = vadd.f32 %v663, %v677
        %v682 = vadd.f32 %v664, %v678
        %v683 = vadd.f32 %v665, %v677
        %v684 = vadd.f32 %v666, %v678
        %v685 = vadd.f32 %v667, %v677
        %v686 = vadd.f32 %v668, %v678
        %v687 = vadd.f32 %v669, %v677
        %v688 = vadd.f32 %v670, %v678
        %v689 = vadd.f32 %v671, %v677
        %v690 = vadd.f32 %v672, %v678
        %v691 = vadd.f32 %v673, %v677
        %v692 = vadd.f32 %v674, %v678
        %v693 = vadd.f32 %v675, %v677
        %v694 = vadd.f32 %v676, %v678
        %v695 = vmax.f32 %v679, %v680
        %v696 = vrot.slane %v695, 4
        %v697 = vmax.f32 %v695, %v696
        %v698 = vrot.slane %v697, 2
        %v699 = vmax.f32 %v697, %v698
        %v700 = vrot.slane %v699, 1
        %v701 = vmax.f32 %v699, %v700
        %v702 = vmax.f32 %v681, %v682
        %v703 = vrot.slane %v702, 4
        %v704 = vmax.f32 %v702, %v703
        %v705 = vrot.slane %v704, 2
        %v706 = vmax.f32 %v704, %v705
        %v707 = vrot.slane %v706, 1
        %v708 = vmax.f32 %v706, %v707
        %v709 = vmax.f32 %v683, %v684
        %v710 = vrot.slane %v709, 4
        %v711 = vmax.f32 %v709, %v710
        %v712 = vrot.slane %v711, 2
        %v713 = vmax.f32 %v711, %v712
        %v714 = vrot.slane %v713, 1
        %v715 = vmax.f32 %v713, %v714
        %v716 = vmax.f32 %v685, %v686
        %v717 = vrot.slane %v716, 4
        %v718 = vmax.f32 %v716, %v717
        %v719 = vrot.slane %v718, 2
        %v720 = vmax.f32 %v718, %v719
        %v721 = vrot.slane %v720, 1
        %v722 = vmax.f32 %v720, %v721
        %v723 = vmax.f32 %v687, %v688
        %v724 = vrot.slane %v723, 4
        %v725 = vmax.f32 %v723, %v724
        %v726 = vrot.slane %v725, 2
        %v727 = vmax.f32 %v725, %v726
        %v728 = vrot.slane %v727, 1
        %v729 = vmax.f32 %v727, %v728
        %v730 = vmax.f32 %v689, %v690
        %v731 = vrot.slane %v730, 4
        %v732 = vmax.f32 %v730, %v731
        %v733 = vrot.slane %v732, 2
        %v734 = vmax.f32 %v732, %v733
        %v735 = vrot.slane %v734, 1
        %v736 = vmax.f32 %v734, %v735
        %v737 = vmax.f32 %v691, %v692
        %v738 = vrot.slane %v737, 4
        %v739 = vmax.f32 %v737, %v738
        %v740 = vrot.slane %v739, 2
        %v741 = vmax.f32 %v739, %v740
        %v742 = vrot.slane %v741, 1
        %v743 = vmax.f32 %v741, %v742
        %v744 = vmax.f32 %v693, %v694
        %v745 = vrot.slane %v744, 4
        %v746 = vmax.f32 %v744, %v745
        %v747 = vrot.slane %v746, 2
        %v748 = vmax.f32 %v746, %v747
        %v749 = vrot.slane %v748, 1
        %v750 = vmax.f32 %v748, %v749
        %v751 = vpack.c.bf16 %v701, %v701
        %v752 = vpack.c.bf16 %v708, %v708
        %v753 = vpack.c.bf16 %v715, %v715
        %v754 = vpack.c.bf16 %v722, %v722
        %v755 = vpack.c.bf16 %v729, %v729
        %v756 = vpack.c.bf16 %v736, %v736
        %v757 = vpack.c.bf16 %v743, %v743
        %v758 = vpack.c.bf16 %v750, %v750
        %v759 = vld [vmem:[#allocation8] sm:$0xf]
        %v760 = vld [vmem:[#allocation8 + $0x4] sm:$0xf]
        %v761 = vld [vmem:[#allocation8 + $0x8] sm:$0xf]
        %v762 = vld [vmem:[#allocation8 + $0xc] sm:$0xf]
        %v763 = vld [vmem:[#allocation8 + $0x10] sm:$0xf]
        %v764 = vld [vmem:[#allocation8 + $0x14] sm:$0xf]
        %v765 = vld [vmem:[#allocation8 + $0x18] sm:$0xf]
        %v766 = vld [vmem:[#allocation8 + $0x1c] sm:$0xf]
        %v767 = vld [vmem:[#allocation8 + $0x20] sm:$0xf]
        %v768 = vld [vmem:[#allocation8 + $0x24] sm:$0xf]
        %v769 = vld [vmem:[#allocation8 + $0x28] sm:$0xf]
        %v770 = vld [vmem:[#allocation8 + $0x2c] sm:$0xf]
        %v771 = vld [vmem:[#allocation8 + $0x30] sm:$0xf]
        %v772 = vld [vmem:[#allocation8 + $0x34] sm:$0xf]
        %v773 = vld [vmem:[#allocation8 + $0x38] sm:$0xf]
        %v774 = vld [vmem:[#allocation8 + $0x3c] sm:$0xf]
        %v775 = vld [vmem:[%s5] sm:$0x1]
        %v777 = vlaneseq
        %v778 = vshrl.u32 %v777, 7
        %v779 = vsub.s32 0, %v778
        %v780 = vrot.slane %v775, %v779
        %v790 = vunpack.c.l.b16 %v751
        %v791 = vunpack.c.l.b16 %v752
        %v792 = vunpack.c.l.b16 %v753
        %v793 = vunpack.c.l.b16 %v754
        %v794 = vunpack.c.l.b16 %v755
        %v795 = vunpack.c.l.b16 %v756
        %v796 = vunpack.c.l.b16 %v757
        %v797 = vunpack.c.l.b16 %v758
        %vm798 = vcmask 1041409
        %v799 = vsel %vm798, %v791, %v790
        %vm800 = vcmask 1042434
        %v801 = vsel %vm800, %v792, %v799
        %vm802 = vcmask 1043459
        %v803 = vsel %vm802, %v793, %v801
        %vm804 = vcmask 1044484
        %v805 = vsel %vm804, %v794, %v803
        %vm806 = vcmask 1045509
        %v807 = vsel %vm806, %v795, %v805
        %vm808 = vcmask 1046534
        %v809 = vsel %vm808, %v796, %v807
        %vm810 = vcmask 1047559
        %v811 = vsel %vm810, %v797, %v809
        %v812 = vpack.c.b16 %v811, %v811
        %v830 = vunpack.c.l.b16 %v759
        %v831 = vunpack.c.l.b16 %v760
        %v832 = vunpack.c.l.b16 %v761
        %v833 = vunpack.c.l.b16 %v762
        %v834 = vunpack.c.l.b16 %v763
        %v835 = vunpack.c.l.b16 %v764
        %v836 = vunpack.c.l.b16 %v765
        %v837 = vunpack.c.l.b16 %v766
        %v838 = vunpack.c.l.b16 %v767
        %v839 = vunpack.c.l.b16 %v768
        %v840 = vunpack.c.l.b16 %v769
        %v841 = vunpack.c.l.b16 %v770
        %v842 = vunpack.c.l.b16 %v771
        %v843 = vunpack.c.l.b16 %v772
        %v844 = vunpack.c.l.b16 %v773
        %v845 = vunpack.c.l.b16 %v774
        %v846 = vpack.c.b16 %v831, %v830
        %v847 = vpack.c.b16 %v833, %v832
        %v848 = vpack.c.b16 %v835, %v834
        %v849 = vpack.c.b16 %v837, %v836
        %v850 = vpack.c.b16 %v839, %v838
        %v851 = vpack.c.b16 %v841, %v840
        %v852 = vpack.c.b16 %v843, %v842
        %v853 = vpack.c.b16 %v845, %v844
        %862 = vmatprep.subr.bf16.mxu0 0
        %863 = vmatpush1.bf16.msra.mxu0 %v853
        %864 = vmatprep.subr.bf16.mxu0 0
        %865 = vmatpush1.bf16.msra.mxu0 %v852
        %866 = vmatprep.subr.bf16.mxu0 0
        %867 = vmatpush1.bf16.msra.mxu0 %v851
        %868 = vmatprep.subr.bf16.mxu0 0
        %869 = vmatpush1.bf16.msra.mxu0 %v850
        %870 = vmatprep.subr.bf16.mxu0 0
        %871 = vmatpush1.bf16.msra.mxu0 %v849
        %872 = vmatprep.subr.bf16.mxu0 0
        %873 = vmatpush1.bf16.msra.mxu0 %v848
        %874 = vmatprep.subr.bf16.mxu0 0
        %875 = vmatpush1.bf16.msra.mxu0 %v847
        %876 = vmatprep.subr.bf16.mxu0 0
        %877 = vmatpush1.bf16.msra.mxu0 %v846
        %878 = vmatprep.subr.bf16.mxu0 0
        %879 = vmatpush2.bf16.msra.mxu0 0
        %880 = vmatprep.subr.bf16.mxu0 0
        %881 = vmatpush2.bf16.msra.mxu0 0
        %882 = vmatprep.subr.bf16.mxu0 0
        %883 = vmatpush2.bf16.msra.mxu0 0
        %884 = vmatprep.subr.bf16.mxu0 0
        %885 = vmatpush2.bf16.msra.mxu0 0
        %886 = vmatprep.subr.bf16.mxu0 0
        %887 = vmatpush2.bf16.msra.mxu0 0
        %888 = vmatprep.subr.bf16.mxu0 0
        %889 = vmatpush2.bf16.msra.mxu0 0
        %890 = vmatprep.subr.bf16.mxu0 0
        %891 = vmatpush2.bf16.msra.mxu0 0
        %892 = vmatprep.subr.bf16.mxu0 0
        %893 = vmatpush2.bf16.msra.mxu0 0
        %894 = vmatprep.mubr.bf16.mxu0 0
        %895 = vmatmul.mubr.bf16.gmra.mxu0 %v812
        %v896 = vpop.f32.mrf.mxu0
        %v897 = vadd.f32 %v780, %v896
        %v898 = vpop.f32.mrf.mxu0
        %v899 = vpop.f32.mrf.mxu0
        %v900 = vpop.f32.mrf.mxu0
        %901 = vdwg.mxu0
        %902 = vmax.xlane.f32.xlu0 %v897
        %v903 = vpop.xlane.xlu0 %902
        %v904 = vsub.f32 %v897, %v903
        %v905 = vmul.f32 %v904, 1.442695
        %v906 = vpow.pop %v905
        %907 = vadd.xlane.f32.xlu0 %v906
        %v908 = vpop.xlane.xlu0 %907
        %v909 = vrcp.pop %v908
        %v910 = vmul.f32 %v906, %v909
        %911 = vst [vmem:[%s314] sm:$0xff] %v910
        %s912 = sand.u32 %s164, 1
        %s913 = scalar_lea.sflag [#allocation4], %s912
        %s914 = sand.u32 %s164, 1
        %s915 = smul.addr %s914, 8
        %s916 = scalar_lea.vmem [#allocation10], %s915
        // Predicated region
        $region61: #{tpu_custom_call.1} parent=43 // pred_check
          %p917 = pneg %p174
        $region62: #{tpu_custom_call.1} parent=43 // pred_check_branch
          %919 = sbr.rel (%p917) target = $region64
        $region63: #{tpu_custom_call.1} parent=43 // pred_region
          %s921 = ssub.s32 128, 128
          %922 = vsyncadd %s913, %s921
          %s923 = smul.addr %s25, 128
          %s924 = scalar_lea.hbm %s6, %s923
          %s926 = sshll.u32 %s916, 4
          %s927 = int_to_ptr.vmem [resolvable:$true] %s926
          %929 = dma.vmem_to_hbm [thread:$0]  %s927, 128, %s924, %s913
        $region64: #{tpu_custom_call.1} parent=43 // pred_fallthru
          _
      $region44: #{tpu_custom_call.1} parent=5 // pred_fallthru
        _
      %p930 = scmp.le.s32.totalorder 2, %s20
      // Predicated region
      $region65: #{tpu_custom_call.1} parent=5 // pred_check
        %p931 = pneg %p930
      $region66: #{tpu_custom_call.1} parent=5 // pred_check_branch
        %933 = sbr.rel (%p931) target = $region68
      $region67: #{tpu_custom_call.1} parent=5 // pred_region
        %s934 = ssub.s32 %s20, 2
        // Predicated region
        $region69: #{tpu_custom_call.1} parent=67 // pred_check
          %p935 = pneg %p180
        $region70: #{tpu_custom_call.1} parent=67 // pred_check_branch
          %937 = sbr.rel (%p935) target = $region72
        $region71: #{tpu_custom_call.1} parent=67 // pred_region
          %s938 = sand.u32 %s165, 1
          %s939 = scalar_lea.sflag [#allocation4], %s938
          %s940 = sand.u32 %s165, 1
          %s941 = smul.addr %s940, 8
          %s942 = scalar_lea.vmem [#allocation10], %s941
          %943 = dma.done %s939, 128
        $region72: #{tpu_custom_call.1} parent=67 // pred_fallthru
          _
      $region68: #{tpu_custom_call.1} parent=5 // pred_fallthru
        _
    $region6: #{tpu_custom_call.1} parent=1 // loop_footer
      %s24 = sadd.s32 1, %s20
    $region7: #{tpu_custom_call.1} parent=1 // loop_footer_branch
      %19 = sbr.rel target = $region3
    $region8: #{tpu_custom_call.1} parent=1 // loop_exit
      _
    %944 = vsyncpa [#allocation3], 1
    %s945 = scalar_lea.sflag [#allocation3], 1
    %946 = vsyncpa %s945, 1
    %947 = vsyncpa [#allocation6], 1
    %948 = vsyncpa [#allocation9], 1
    %949 = vsyncpa [#allocation4], 1
    %s950 = scalar_lea.sflag [#allocation4], 1
    %951 = vsyncpa %s950, 1

</llo_original>
